<compile_context>
chip_gen: v7x
topology: tpu7x:2x2x1
jax: 0.10.0
libtpu: 0.0.40
codegen_flags: <defaults>
</compile_context>

<pallas_src>
import jax
import jax.numpy as jnp
from jax import lax
from jax.experimental import pallas as pl
from jax.experimental.pallas import tpu as pltpu

EPS = 1e-5


def _silu(x):
    return x * jax.nn.sigmoid(x)


# --------------------------------------------------------------------------
# Fused DownSample kernel
# --------------------------------------------------------------------------
def _downsample_kernel(x_ref, xt_ref, w1_ref, sb1_ref, w2a_ref, sb2a_ref,
                       w2b_ref, sb2b_ref, o_ref, y_scr):
    # x_ref : (1, TH, 2, Wo, 2*Cin)   main row-tile, (row-pair, row-parity, col-pair, parity*C)
    # xt_ref: (1, 1,  2, Wo, 2*Cin)   row-pair just above the tile (top halo)
    # w1/w2a: (Cin, inter)            folded 1x1 convs
    # w2b   : (9, inter, inter)       3x3 conv taps, index = kh*3 + kw, (cin, cout)
    # sb*   : (2, inter)              [scale; bias] of folded BatchNorm
    # o_ref : (1, TH, Wo, 2*inter)    both branches, channel-concatenated
    # y_scr : (2, 2, TH+1, Wo+1, inter) f32 parity-decomposed, zero-padded y
    th = x_ref.shape[1]
    wo = x_ref.shape[3]
    cin = x_ref.shape[4] // 2
    inter = w1_ref.shape[1]
    m = th * wo
    mm_dtype = w1_ref.dtype
    t = pl.program_id(1)

    xv = x_ref[0]                       # (TH, 2, Wo, 2*Cin)
    x00 = xv[:, 0, :, :cin]             # even row, even col
    x01 = xv[:, 0, :, cin:]             # even row, odd col
    x10 = xv[:, 1, :, :cin]             # odd row,  even col
    x11 = xv[:, 1, :, cin:]             # odd row,  odd col

    # ---- branch 1: 2x2 maxpool -> 1x1 conv -> BN -> SiLU -----------------
    pooled = jnp.maximum(jnp.maximum(x00, x01), jnp.maximum(x10, x11))
    y1 = jnp.dot(pooled.reshape(m, cin).astype(mm_dtype), w1_ref[...],
                 preferred_element_type=jnp.float32)
    y1 = _silu(y1 * sb1_ref[0:1, :] + sb1_ref[1:2, :]).reshape(th, wo, inter)

    # ---- branch 2a: 1x1 conv -> BN -> SiLU into padded parity scratch ----
    def conv1(x2d):                     # (rows, cin) -> (rows, inter) f32
        y = jnp.dot(x2d.astype(mm_dtype), w2a_ref[...],
                    preferred_element_type=jnp.float32)
        return _silu(y * sb2a_ref[0:1, :] + sb2a_ref[1:2, :])

    def padl(v):                        # prepend one zero column (axis=-2)
        z = jnp.zeros(v.shape[:-2] + (1, v.shape[-1]), v.dtype)
        return jnp.concatenate([z, v], axis=-2)

    y00 = conv1(x00.reshape(m, cin)).reshape(th, wo, inter)
    y01 = conv1(x01.reshape(m, cin)).reshape(th, wo, inter)
    y10 = conv1(x10.reshape(m, cin)).reshape(th, wo, inter)
    y11 = conv1(x11.reshape(m, cin)).reshape(th, wo, inter)

    # scratch layout: y_scr[p, q, a, b, :] = padded-y at row j = 2a + p and
    # col i = 2b + q, where the padding is one zero row on top (j = 0) and one
    # zero column on the left (i = 0) of the tile (the only pads a 3x3/s2/p1
    # conv touches when H, W are even).
    y_scr[1, 1, 0:th, 0:wo, :] = y00            # j = 2a+1, i = 2b+1
    y_scr[1, 0, 0:th, :, :] = padl(y01)         # j = 2a+1, i = 2b   (b >= 1)
    y_scr[0, 1, 1:th + 1, 0:wo, :] = y10        # j = 2a,   i = 2b+1
    y_scr[0, 0, 1:th + 1, :, :] = padl(y11)     # j = 2a,   i = 2b   (b >= 1)

    # top halo row = image row just above the tile; zero at the image border
    top_valid = (t > 0).astype(jnp.float32)
    xt = xt_ref[0, 0, 1]                        # (Wo, 2*Cin): odd row of pair above
    yt_e = conv1(xt[:, :cin]) * top_valid       # (Wo, inter)
    yt_o = conv1(xt[:, cin:]) * top_valid
    y_scr[0, 1, 0, 0:wo, :] = yt_e
    y_scr[0, 0, 0, :, :] = padl(yt_o)

    # ---- branch 2b: 3x3 stride-2 conv as 9 accumulated matmuls -----------
    acc = jnp.zeros((m, inter), jnp.float32)
    for kh in range(3):
        for kw in range(3):
            tap = y_scr[kh & 1, kw & 1,
                        pl.ds(kh >> 1, th), pl.ds(kw >> 1, wo), :]
            acc = acc + jnp.dot(tap.reshape(m, inter).astype(mm_dtype),
                                w2b_ref[kh * 3 + kw],
                                preferred_element_type=jnp.float32)
    y2 = _silu(acc * sb2b_ref[0:1, :] + sb2b_ref[1:2, :]).reshape(th, wo, inter)

    # ---- single lane-dense store of both branches (no HBM concat pass) ---
    o_ref[0] = jnp.concatenate([y1, y2], axis=-1).astype(o_ref.dtype)


# --------------------------------------------------------------------------
# Parameter handling
# --------------------------------------------------------------------------
def fold_bn(gamma, beta, mean, var, eps=EPS):
    scale = gamma / jnp.sqrt(var + eps)
    bias = beta - mean * scale
    return jnp.stack([scale, bias], axis=0)          # (2, C)


def init_params(key, in_dim):
    inter = in_dim // 2
    ks = jax.random.split(key, 6)

    def bn(k, c):
        k1, k2, k3, k4 = jax.random.split(k, 4)
        gamma = 1.0 + 0.1 * jax.random.normal(k1, (c,), jnp.float32)
        beta = 0.1 * jax.random.normal(k2, (c,), jnp.float32)
        mean = 0.1 * jax.random.normal(k3, (c,), jnp.float32)
        var = 0.5 + jnp.abs(jax.random.normal(k4, (c,), jnp.float32))
        return (gamma, beta, mean, var)

    return {
        "w1":   0.2 * jax.random.normal(ks[0], (inter, in_dim, 1, 1), jnp.float32),
        "bn1":  bn(ks[1], inter),
        "w2a":  0.2 * jax.random.normal(ks[2], (inter, in_dim, 1, 1), jnp.float32),
        "bn2a": bn(ks[3], inter),
        "w2b":  0.2 * jax.random.normal(ks[4], (inter, inter, 3, 3), jnp.float32),
        "bn2b": bn(ks[5], inter),
    }


# --------------------------------------------------------------------------
# Wrapper
# --------------------------------------------------------------------------
def _pick_tile_rows(ho, wo, cin):
    # largest divisor of Ho keeping ~<=1024 matmul rows per step and the main
    # input tile at a few MiB (fits double-buffered in every generation's VMEM)
    best = 1
    for th in range(1, ho + 1):
        if ho % th == 0 and th * wo <= 1024 and 16 * th * wo * cin <= (4 << 20):
            best = th
    return best


def downsample_pallas(x_nchw, params, tile_rows=None, matmul_dtype=jnp.bfloat16):
    # TODO(synk): hoist the NCHW<->NHWC transposes if the surrounding net is NHWC.
    x = jnp.transpose(x_nchw, (0, 2, 3, 1))                 # NCHW -> NHWC
    B, H, W, C = x.shape
    assert H % 2 == 0 and W % 2 == 0, "DownSample expects even H and W"
    Ho, Wo = H // 2, W // 2
    inter = params["w1"].shape[0]

    w1 = jnp.transpose(params["w1"][:, :, 0, 0], (1, 0)).astype(matmul_dtype)
    w2a = jnp.transpose(params["w2a"][:, :, 0, 0], (1, 0)).astype(matmul_dtype)
    # OIHW -> (kh, kw, cin, cout) -> (9, cin, cout)
    w2b = jnp.transpose(params["w2b"], (2, 3, 1, 0)).reshape(9, inter, inter)
    w2b = w2b.astype(matmul_dtype)
    sb1 = fold_bn(*params["bn1"])
    sb2a = fold_bn(*params["bn2a"])
    sb2b = fold_bn(*params["bn2b"])

    th = tile_rows if tile_rows is not None else _pick_tile_rows(Ho, Wo, C)
    assert Ho % th == 0, "tile_rows must divide H//2"
    nt = Ho // th

    # free (metadata-only) reshape: fold the 2x2 stride pattern
    xr = x.reshape(B, Ho, 2, Wo, 2 * C)

    x_main_spec = pl.BlockSpec((1, th, 2, Wo, 2 * C),
                               lambda b, t: (b, t, 0, 0, 0))
    x_halo_spec = pl.BlockSpec(
        (1, 1, 2, Wo, 2 * C),
        lambda b, t: (b, jnp.maximum(t * th - 1, 0), 0, 0, 0))

    def full(shape):
        return pl.BlockSpec(shape, lambda b, t, _s=len(shape): (0,) * _s)

    out = pl.pallas_call(
        _downsample_kernel,
        out_shape=jax.ShapeDtypeStruct((B, Ho, Wo, 2 * inter), x.dtype),
        grid=(B, nt),
        in_specs=[x_main_spec, x_halo_spec,
                  full((C, inter)), full((2, inter)),
                  full((C, inter)), full((2, inter)),
                  full((9, inter, inter)), full((2, inter))],
        out_specs=pl.BlockSpec((1, th, Wo, 2 * inter),
                               lambda b, t: (b, t, 0, 0)),
        scratch_shapes=[pltpu.VMEM((2, 2, th + 1, Wo + 1, inter), jnp.float32)],
        compiler_params=pltpu.CompilerParams(
            dimension_semantics=("parallel", "parallel")),
    )(xr, xr, w1, sb1, w2a, sb2a, w2b, sb2b)

    return jnp.transpose(out, (0, 3, 1, 2))                 # NHWC -> NCHW


# --------------------------------------------------------------------------
# Pure-JAX reference (eval-mode PyTorch semantics)
# --------------------------------------------------------------------------
def downsample_ref(x, params):
    def conv_bn_silu(x, w, bn, stride, pad):
        y = lax.conv_general_dilated(
            x, w, (stride, stride), [(pad, pad), (pad, pad)],
            dimension_numbers=("NCHW", "OIHW", "NCHW"))
        g, b, m, v = [a.reshape(1, -1, 1, 1) for a in bn]
        y = (y - m) / jnp.sqrt(v + EPS) * g + b
        return y * jax.nn.sigmoid(y)

    mp = lax.reduce_window(x, -jnp.inf, lax.max, (1, 1, 2, 2), (1, 1, 2, 2), "VALID")
    x1 = conv_bn_silu(mp, params["w1"], params["bn1"], 1, 0)
    x2 = conv_bn_silu(x, params["w2a"], params["bn2a"], 1, 0)
    x2 = conv_bn_silu(x2, params["w2b"], params["bn2b"], 2, 1)
    return jnp.concatenate([x1, x2], axis=1)


if __name__ == "__main__":
    key = jax.random.PRNGKey(0)
    kx, kp = jax.random.split(key)
    B, C, H, W = 2, 4, 16, 16
    x = jax.random.normal(kx, (B, C, H, W), jnp.float32)
    params = init_params(kp, C)

    ref = downsample_ref(x, params)

    # f32 matmul path with 4 row-tiles: exercises the halo / border logic,
    # checked tightly against the reference.
    out_f32 = jax.block_until_ready(
        downsample_pallas(x, params, tile_rows=2, matmul_dtype=jnp.float32))
    assert out_f32.shape == (B, C, H // 2, W // 2), out_f32.shape
    assert jnp.allclose(out_f32, ref, atol=1e-3, rtol=1e-3), \
        float(jnp.max(jnp.abs(out_f32 - ref)))

    # default path: heuristic tiling + bf16 matmul operands (f32 accumulate),
    # checked with a bf16-appropriate tolerance.
    out_bf16 = jax.block_until_ready(downsample_pallas(x, params))
    assert out_bf16.shape == (B, C, H // 2, W // 2), out_bf16.shape
    assert jnp.allclose(out_bf16, ref, atol=5e-2, rtol=5e-2), \
        float(jnp.max(jnp.abs(out_bf16 - ref)))

    print("KERNEL_OK")
</pallas_src>

<mosaic_0001>
module attributes {stable_mosaic.version = 11 : i64} {
  func.func @_downsample_kernel(%arg0: i32, %arg1: i32, %arg2: memref<1x2x2x8x8xf32, #tpu.memory_space<vmem>>, %arg3: memref<1x1x2x8x8xf32, #tpu.memory_space<vmem>>, %arg4: memref<4x2xf32, #tpu.memory_space<vmem>>, %arg5: memref<2x2xf32, #tpu.memory_space<vmem>>, %arg6: memref<4x2xf32, #tpu.memory_space<vmem>>, %arg7: memref<2x2xf32, #tpu.memory_space<vmem>>, %arg8: memref<9x2x2xf32, #tpu.memory_space<vmem>>, %arg9: memref<2x2xf32, #tpu.memory_space<vmem>>, %arg10: memref<1x2x8x4xf32, #tpu.memory_space<vmem>>, %arg11: memref<2x2x3x9x2xf32, #tpu.memory_space<vmem>>) attributes {dimension_semantics = [#tpu.dimension_semantics<parallel>, #tpu.dimension_semantics<parallel>], iteration_bounds = array<i64: 2, 4>, scalar_prefetch = 0 : i64, scratch_operands = 1 : i64, tpu.core_type = #tpu.core_type<tc>, window_params = [{transform_indices = @transform_0, window_bounds = array<i64: 1, 2, 2, 8, 8>}, {transform_indices = @transform_1, window_bounds = array<i64: 1, 1, 2, 8, 8>}, {pipeline_mode = #tpu.pipeline_mode<synchronous>, transform_indices = @transform_2, window_bounds = array<i64: 4, 2>}, {pipeline_mode = #tpu.pipeline_mode<synchronous>, transform_indices = @transform_3, window_bounds = array<i64: 2, 2>}, {pipeline_mode = #tpu.pipeline_mode<synchronous>, transform_indices = @transform_4, window_bounds = array<i64: 4, 2>}, {pipeline_mode = #tpu.pipeline_mode<synchronous>, transform_indices = @transform_5, window_bounds = array<i64: 2, 2>}, {pipeline_mode = #tpu.pipeline_mode<synchronous>, transform_indices = @transform_6, window_bounds = array<i64: 9, 2, 2>}, {pipeline_mode = #tpu.pipeline_mode<synchronous>, transform_indices = @transform_7, window_bounds = array<i64: 2, 2>}, {transform_indices = @transform_8, window_bounds = array<i64: 1, 2, 8, 4>}]} {
    %c0 = arith.constant 0 : index
    %c0_0 = arith.constant 0 : index
    %c0_1 = arith.constant 0 : index
    %c0_2 = arith.constant 0 : index
    %c0_3 = arith.constant 0 : index
    %0 = vector.load %arg2[%c0, %c0_0, %c0_1, %c0_2, %c0_3] : memref<1x2x2x8x8xf32, #tpu.memory_space<vmem>>, vector<1x2x2x8x8xf32>
    %1 = vector.shape_cast %0 : vector<1x2x2x8x8xf32> to vector<2x2x8x8xf32>
    %2 = vector.extract_strided_slice %1 {offsets = [0, 0, 0, 0], sizes = [2, 1, 8, 4], strides = [1, 1, 1, 1]} : vector<2x2x8x8xf32> to vector<2x1x8x4xf32>
    %3 = vector.shape_cast %2 : vector<2x1x8x4xf32> to vector<2x8x4xf32>
    %4 = vector.extract_strided_slice %1 {offsets = [0, 0, 0, 4], sizes = [2, 1, 8, 4], strides = [1, 1, 1, 1]} : vector<2x2x8x8xf32> to vector<2x1x8x4xf32>
    %5 = vector.shape_cast %4 : vector<2x1x8x4xf32> to vector<2x8x4xf32>
    %6 = vector.extract_strided_slice %1 {offsets = [0, 1, 0, 0], sizes = [2, 1, 8, 4], strides = [1, 1, 1, 1]} : vector<2x2x8x8xf32> to vector<2x1x8x4xf32>
    %7 = vector.shape_cast %6 : vector<2x1x8x4xf32> to vector<2x8x4xf32>
    %8 = vector.extract_strided_slice %1 {offsets = [0, 1, 0, 4], sizes = [2, 1, 8, 4], strides = [1, 1, 1, 1]} : vector<2x2x8x8xf32> to vector<2x1x8x4xf32>
    %9 = vector.shape_cast %8 : vector<2x1x8x4xf32> to vector<2x8x4xf32>
    %10 = arith.maximumf %3, %5 : vector<2x8x4xf32>
    %11 = arith.maximumf %7, %9 : vector<2x8x4xf32>
    %12 = arith.maximumf %10, %11 : vector<2x8x4xf32>
    %13 = vector.shape_cast %12 : vector<2x8x4xf32> to vector<16x4xf32>
    %c0_4 = arith.constant 0 : index
    %c0_5 = arith.constant 0 : index
    %14 = vector.load %arg4[%c0_4, %c0_5] : memref<4x2xf32, #tpu.memory_space<vmem>>, vector<4x2xf32>
    %cst = arith.constant dense<0.000000e+00> : vector<16x2xf32>
    %15 = tpu.matmul %13, %14, %cst {dimension_numbers = #tpu.dot_dimension_numbers<[1], [0], [0], [1], [0, 0, 1, 1], [], []>} : vector<16x4xf32>, vector<4x2xf32>, vector<16x2xf32> -> vector<16x2xf32>
    %c0_6 = arith.constant 0 : index
    %c0_7 = arith.constant 0 : index
    %16 = vector.load %arg5[%c0_6, %c0_7] : memref<2x2xf32, #tpu.memory_space<vmem>>, vector<1x2xf32>
    %17 = vector.broadcast %16 : vector<1x2xf32> to vector<16x2xf32>
    %18 = arith.mulf %15, %17 : vector<16x2xf32>
    %c1 = arith.constant 1 : index
    %c0_8 = arith.constant 0 : index
    %19 = vector.load %arg5[%c1, %c0_8] : memref<2x2xf32, #tpu.memory_space<vmem>>, vector<1x2xf32>
    %20 = vector.broadcast %19 : vector<1x2xf32> to vector<16x2xf32>
    %21 = arith.addf %18, %20 : vector<16x2xf32>
    %22 = arith.negf %21 : vector<16x2xf32>
    %23 = math.exp %22 : vector<16x2xf32>
    %cst_9 = arith.constant 1.000000e+00 : f32
    %24 = vector.broadcast %cst_9 : f32 to vector<16x2xf32>
    %25 = arith.addf %24, %23 : vector<16x2xf32>
    %26 = arith.divf %24, %25 : vector<16x2xf32>
    %27 = arith.mulf %21, %26 : vector<16x2xf32>
    %28 = vector.shape_cast %27 : vector<16x2xf32> to vector<2x8x2xf32>
    %29 = vector.shape_cast %3 : vector<2x8x4xf32> to vector<16x4xf32>
    %c0_10 = arith.constant 0 : index
    %c0_11 = arith.constant 0 : index
    %30 = vector.load %arg6[%c0_10, %c0_11] : memref<4x2xf32, #tpu.memory_space<vmem>>, vector<4x2xf32>
    %cst_12 = arith.constant dense<0.000000e+00> : vector<16x2xf32>
    %31 = tpu.matmul %29, %30, %cst_12 {dimension_numbers = #tpu.dot_dimension_numbers<[1], [0], [0], [1], [0, 0, 1, 1], [], []>} : vector<16x4xf32>, vector<4x2xf32>, vector<16x2xf32> -> vector<16x2xf32>
    %c0_13 = arith.constant 0 : index
    %c0_14 = arith.constant 0 : index
    %32 = vector.load %arg7[%c0_13, %c0_14] : memref<2x2xf32, #tpu.memory_space<vmem>>, vector<1x2xf32>
    %33 = vector.broadcast %32 : vector<1x2xf32> to vector<16x2xf32>
    %34 = arith.mulf %31, %33 : vector<16x2xf32>
    %c1_15 = arith.constant 1 : index
    %c0_16 = arith.constant 0 : index
    %35 = vector.load %arg7[%c1_15, %c0_16] : memref<2x2xf32, #tpu.memory_space<vmem>>, vector<1x2xf32>
    %36 = vector.broadcast %35 : vector<1x2xf32> to vector<16x2xf32>
    %37 = arith.addf %34, %36 : vector<16x2xf32>
    %38 = arith.negf %37 : vector<16x2xf32>
    %39 = math.exp %38 : vector<16x2xf32>
    %cst_17 = arith.constant 1.000000e+00 : f32
    %40 = vector.broadcast %cst_17 : f32 to vector<16x2xf32>
    %41 = arith.addf %40, %39 : vector<16x2xf32>
    %42 = arith.divf %40, %41 : vector<16x2xf32>
    %43 = arith.mulf %37, %42 : vector<16x2xf32>
    %44 = vector.shape_cast %43 : vector<16x2xf32> to vector<2x8x2xf32>
    %45 = vector.shape_cast %5 : vector<2x8x4xf32> to vector<16x4xf32>
    %c0_18 = arith.constant 0 : index
    %c0_19 = arith.constant 0 : index
    %46 = vector.load %arg6[%c0_18, %c0_19] : memref<4x2xf32, #tpu.memory_space<vmem>>, vector<4x2xf32>
    %cst_20 = arith.constant dense<0.000000e+00> : vector<16x2xf32>
    %47 = tpu.matmul %45, %46, %cst_20 {dimension_numbers = #tpu.dot_dimension_numbers<[1], [0], [0], [1], [0, 0, 1, 1], [], []>} : vector<16x4xf32>, vector<4x2xf32>, vector<16x2xf32> -> vector<16x2xf32>
    %c0_21 = arith.constant 0 : index
    %c0_22 = arith.constant 0 : index
    %48 = vector.load %arg7[%c0_21, %c0_22] : memref<2x2xf32, #tpu.memory_space<vmem>>, vector<1x2xf32>
    %49 = vector.broadcast %48 : vector<1x2xf32> to vector<16x2xf32>
    %50 = arith.mulf %47, %49 : vector<16x2xf32>
    %c1_23 = arith.constant 1 : index
    %c0_24 = arith.constant 0 : index
    %51 = vector.load %arg7[%c1_23, %c0_24] : memref<2x2xf32, #tpu.memory_space<vmem>>, vector<1x2xf32>
    %52 = vector.broadcast %51 : vector<1x2xf32> to vector<16x2xf32>
    %53 = arith.addf %50, %52 : vector<16x2xf32>
    %54 = arith.negf %53 : vector<16x2xf32>
    %55 = math.exp %54 : vector<16x2xf32>
    %cst_25 = arith.constant 1.000000e+00 : f32
    %56 = vector.broadcast %cst_25 : f32 to vector<16x2xf32>
    %57 = arith.addf %56, %55 : vector<16x2xf32>
    %58 = arith.divf %56, %57 : vector<16x2xf32>
    %59 = arith.mulf %53, %58 : vector<16x2xf32>
    %60 = vector.shape_cast %59 : vector<16x2xf32> to vector<2x8x2xf32>
    %61 = vector.shape_cast %7 : vector<2x8x4xf32> to vector<16x4xf32>
    %c0_26 = arith.constant 0 : index
    %c0_27 = arith.constant 0 : index
    %62 = vector.load %arg6[%c0_26, %c0_27] : memref<4x2xf32, #tpu.memory_space<vmem>>, vector<4x2xf32>
    %cst_28 = arith.constant dense<0.000000e+00> : vector<16x2xf32>
    %63 = tpu.matmul %61, %62, %cst_28 {dimension_numbers = #tpu.dot_dimension_numbers<[1], [0], [0], [1], [0, 0, 1, 1], [], []>} : vector<16x4xf32>, vector<4x2xf32>, vector<16x2xf32> -> vector<16x2xf32>
    %c0_29 = arith.constant 0 : index
    %c0_30 = arith.constant 0 : index
    %64 = vector.load %arg7[%c0_29, %c0_30] : memref<2x2xf32, #tpu.memory_space<vmem>>, vector<1x2xf32>
    %65 = vector.broadcast %64 : vector<1x2xf32> to vector<16x2xf32>
    %66 = arith.mulf %63, %65 : vector<16x2xf32>
    %c1_31 = arith.constant 1 : index
    %c0_32 = arith.constant 0 : index
    %67 = vector.load %arg7[%c1_31, %c0_32] : memref<2x2xf32, #tpu.memory_space<vmem>>, vector<1x2xf32>
    %68 = vector.broadcast %67 : vector<1x2xf32> to vector<16x2xf32>
    %69 = arith.addf %66, %68 : vector<16x2xf32>
    %70 = arith.negf %69 : vector<16x2xf32>
    %71 = math.exp %70 : vector<16x2xf32>
    %cst_33 = arith.constant 1.000000e+00 : f32
    %72 = vector.broadcast %cst_33 : f32 to vector<16x2xf32>
    %73 = arith.addf %72, %71 : vector<16x2xf32>
    %74 = arith.divf %72, %73 : vector<16x2xf32>
    %75 = arith.mulf %69, %74 : vector<16x2xf32>
    %76 = vector.shape_cast %75 : vector<16x2xf32> to vector<2x8x2xf32>
    %77 = vector.shape_cast %9 : vector<2x8x4xf32> to vector<16x4xf32>
    %c0_34 = arith.constant 0 : index
    %c0_35 = arith.constant 0 : index
    %78 = vector.load %arg6[%c0_34, %c0_35] : memref<4x2xf32, #tpu.memory_space<vmem>>, vector<4x2xf32>
    %cst_36 = arith.constant dense<0.000000e+00> : vector<16x2xf32>
    %79 = tpu.matmul %77, %78, %cst_36 {dimension_numbers = #tpu.dot_dimension_numbers<[1], [0], [0], [1], [0, 0, 1, 1], [], []>} : vector<16x4xf32>, vector<4x2xf32>, vector<16x2xf32> -> vector<16x2xf32>
    %c0_37 = arith.constant 0 : index
    %c0_38 = arith.constant 0 : index
    %80 = vector.load %arg7[%c0_37, %c0_38] : memref<2x2xf32, #tpu.memory_space<vmem>>, vector<1x2xf32>
    %81 = vector.broadcast %80 : vector<1x2xf32> to vector<16x2xf32>
    %82 = arith.mulf %79, %81 : vector<16x2xf32>
    %c1_39 = arith.constant 1 : index
    %c0_40 = arith.constant 0 : index
    %83 = vector.load %arg7[%c1_39, %c0_40] : memref<2x2xf32, #tpu.memory_space<vmem>>, vector<1x2xf32>
    %84 = vector.broadcast %83 : vector<1x2xf32> to vector<16x2xf32>
    %85 = arith.addf %82, %84 : vector<16x2xf32>
    %86 = arith.negf %85 : vector<16x2xf32>
    %87 = math.exp %86 : vector<16x2xf32>
    %cst_41 = arith.constant 1.000000e+00 : f32
    %88 = vector.broadcast %cst_41 : f32 to vector<16x2xf32>
    %89 = arith.addf %88, %87 : vector<16x2xf32>
    %90 = arith.divf %88, %89 : vector<16x2xf32>
    %91 = arith.mulf %85, %90 : vector<16x2xf32>
    %92 = vector.shape_cast %91 : vector<16x2xf32> to vector<2x8x2xf32>
    %c1_42 = arith.constant 1 : index
    %c1_43 = arith.constant 1 : index
    %c0_44 = arith.constant 0 : index
    %c0_45 = arith.constant 0 : index
    %c0_46 = arith.constant 0 : index
    %93 = vector.load %arg11[%c1_42, %c1_43, %c0_44, %c0_45, %c0_46] : memref<2x2x3x9x2xf32, #tpu.memory_space<vmem>>, vector<1x1x2x8x2xf32>
    %94 = vector.shape_cast %93 : vector<1x1x2x8x2xf32> to vector<2x8x2xf32>
    %95 = vector.shape_cast %44 : vector<2x8x2xf32> to vector<1x1x2x8x2xf32>
    tpu.vector_store %arg11[%c1_42, %c1_43, %c0_44, %c0_45, %c0_46], %95 {strides = array<i32>} : memref<2x2x3x9x2xf32, #tpu.memory_space<vmem>>, vector<1x1x2x8x2xf32>,
    %cst_47 = arith.constant 0.000000e+00 : f32
    %96 = vector.broadcast %cst_47 : f32 to vector<2x1x2xf32>
    %97 = tpu.concatenate %96, %60 in 1 : vector<2x1x2xf32>, vector<2x8x2xf32> -> vector<2x9x2xf32>
    %c1_48 = arith.constant 1 : index
    %c0_49 = arith.constant 0 : index
    %c0_50 = arith.constant 0 : index
    %c0_51 = arith.constant 0 : index
    %c0_52 = arith.constant 0 : index
    %98 = vector.load %arg11[%c1_48, %c0_49, %c0_50, %c0_51, %c0_52] : memref<2x2x3x9x2xf32, #tpu.memory_space<vmem>>, vector<1x1x2x9x2xf32>
    %99 = vector.shape_cast %98 : vector<1x1x2x9x2xf32> to vector<2x9x2xf32>
    %100 = vector.shape_cast %97 : vector<2x9x2xf32> to vector<1x1x2x9x2xf32>
    tpu.vector_store %arg11[%c1_48, %c0_49, %c0_50, %c0_51, %c0_52], %100 {strides = array<i32>} : memref<2x2x3x9x2xf32, #tpu.memory_space<vmem>>, vector<1x1x2x9x2xf32>,
    %c0_53 = arith.constant 0 : index
    %c1_54 = arith.constant 1 : index
    %c1_55 = arith.constant 1 : index
    %c0_56 = arith.constant 0 : index
    %c0_57 = arith.constant 0 : index
    %101 = vector.load %arg11[%c0_53, %c1_54, %c1_55, %c0_56, %c0_57] : memref<2x2x3x9x2xf32, #tpu.memory_space<vmem>>, vector<1x1x2x8x2xf32>
    %102 = vector.shape_cast %101 : vector<1x1x2x8x2xf32> to vector<2x8x2xf32>
    %103 = vector.shape_cast %76 : vector<2x8x2xf32> to vector<1x1x2x8x2xf32>
    tpu.vector_store %arg11[%c0_53, %c1_54, %c1_55, %c0_56, %c0_57], %103 {strides = array<i32>} : memref<2x2x3x9x2xf32, #tpu.memory_space<vmem>>, vector<1x1x2x8x2xf32>,
    %cst_58 = arith.constant 0.000000e+00 : f32
    %104 = vector.broadcast %cst_58 : f32 to vector<2x1x2xf32>
    %105 = tpu.concatenate %104, %92 in 1 : vector<2x1x2xf32>, vector<2x8x2xf32> -> vector<2x9x2xf32>
    %c0_59 = arith.constant 0 : index
    %c0_60 = arith.constant 0 : index
    %c1_61 = arith.constant 1 : index
    %c0_62 = arith.constant 0 : index
    %c0_63 = arith.constant 0 : index
    %106 = vector.load %arg11[%c0_59, %c0_60, %c1_61, %c0_62, %c0_63] : memref<2x2x3x9x2xf32, #tpu.memory_space<vmem>>, vector<1x1x2x9x2xf32>
    %107 = vector.shape_cast %106 : vector<1x1x2x9x2xf32> to vector<2x9x2xf32>
    %108 = vector.shape_cast %105 : vector<2x9x2xf32> to vector<1x1x2x9x2xf32>
    tpu.vector_store %arg11[%c0_59, %c0_60, %c1_61, %c0_62, %c0_63], %108 {strides = array<i32>} : memref<2x2x3x9x2xf32, #tpu.memory_space<vmem>>, vector<1x1x2x9x2xf32>,
    %c0_i32 = arith.constant 0 : i32
    %109 = arith.cmpi sgt, %arg1, %c0_i32 : i32
    %110 = arith.extui %109 : i1 to i32
    %111 = arith.sitofp %110 : i32 to f32
    %c0_64 = arith.constant 0 : index
    %c0_65 = arith.constant 0 : index
    %c1_66 = arith.constant 1 : index
    %c0_67 = arith.constant 0 : index
    %c0_68 = arith.constant 0 : index
    %112 = vector.load %arg3[%c0_64, %c0_65, %c1_66, %c0_67, %c0_68] : memref<1x1x2x8x8xf32, #tpu.memory_space<vmem>>, vector<1x1x1x8x8xf32>
    %113 = vector.shape_cast %112 : vector<1x1x1x8x8xf32> to vector<8x8xf32>
    %114 = vector.extract_strided_slice %113 {offsets = [0, 0], sizes = [8, 4], strides = [1, 1]} : vector<8x8xf32> to vector<8x4xf32>
    %c0_69 = arith.constant 0 : index
    %c0_70 = arith.constant 0 : index
    %115 = vector.load %arg6[%c0_69, %c0_70] : memref<4x2xf32, #tpu.memory_space<vmem>>, vector<4x2xf32>
    %cst_71 = arith.constant dense<0.000000e+00> : vector<8x2xf32>
    %116 = tpu.matmul %114, %115, %cst_71 {dimension_numbers = #tpu.dot_dimension_numbers<[1], [0], [0], [1], [0, 0, 1, 1], [], []>} : vector<8x4xf32>, vector<4x2xf32>, vector<8x2xf32> -> vector<8x2xf32>
    %c0_72 = arith.constant 0 : index
    %c0_73 = arith.constant 0 : index
    %117 = vector.load %arg7[%c0_72, %c0_73] : memref<2x2xf32, #tpu.memory_space<vmem>>, vector<1x2xf32>
    %118 = vector.broadcast %117 : vector<1x2xf32> to vector<8x2xf32>
    %119 = arith.mulf %116, %118 : vector<8x2xf32>
    %c1_74 = arith.constant 1 : index
    %c0_75 = arith.constant 0 : index
    %120 = vector.load %arg7[%c1_74, %c0_75] : memref<2x2xf32, #tpu.memory_space<vmem>>, vector<1x2xf32>
    %121 = vector.broadcast %120 : vector<1x2xf32> to vector<8x2xf32>
    %122 = arith.addf %119, %121 : vector<8x2xf32>
    %123 = arith.negf %122 : vector<8x2xf32>
    %124 = math.exp %123 : vector<8x2xf32>
    %cst_76 = arith.constant 1.000000e+00 : f32
    %125 = vector.broadcast %cst_76 : f32 to vector<8x2xf32>
    %126 = arith.addf %125, %124 : vector<8x2xf32>
    %127 = arith.divf %125, %126 : vector<8x2xf32>
    %128 = arith.mulf %122, %127 : vector<8x2xf32>
    %129 = vector.broadcast %111 : f32 to vector<8x2xf32>
    %130 = arith.mulf %128, %129 : vector<8x2xf32>
    %131 = vector.extract_strided_slice %113 {offsets = [0, 4], sizes = [8, 4], strides = [1, 1]} : vector<8x8xf32> to vector<8x4xf32>
    %c0_77 = arith.constant 0 : index
    %c0_78 = arith.constant 0 : index
    %132 = vector.load %arg6[%c0_77, %c0_78] : memref<4x2xf32, #tpu.memory_space<vmem>>, vector<4x2xf32>
    %cst_79 = arith.constant dense<0.000000e+00> : vector<8x2xf32>
    %133 = tpu.matmul %131, %132, %cst_79 {dimension_numbers = #tpu.dot_dimension_numbers<[1], [0], [0], [1], [0, 0, 1, 1], [], []>} : vector<8x4xf32>, vector<4x2xf32>, vector<8x2xf32> -> vector<8x2xf32>
    %c0_80 = arith.constant 0 : index
    %c0_81 = arith.constant 0 : index
    %134 = vector.load %arg7[%c0_80, %c0_81] : memref<2x2xf32, #tpu.memory_space<vmem>>, vector<1x2xf32>
    %135 = vector.broadcast %134 : vector<1x2xf32> to vector<8x2xf32>
    %136 = arith.mulf %133, %135 : vector<8x2xf32>
    %c1_82 = arith.constant 1 : index
    %c0_83 = arith.constant 0 : index
    %137 = vector.load %arg7[%c1_82, %c0_83] : memref<2x2xf32, #tpu.memory_space<vmem>>, vector<1x2xf32>
    %138 = vector.broadcast %137 : vector<1x2xf32> to vector<8x2xf32>
    %139 = arith.addf %136, %138 : vector<8x2xf32>
    %140 = arith.negf %139 : vector<8x2xf32>
    %141 = math.exp %140 : vector<8x2xf32>
    %cst_84 = arith.constant 1.000000e+00 : f32
    %142 = vector.broadcast %cst_84 : f32 to vector<8x2xf32>
    %143 = arith.addf %142, %141 : vector<8x2xf32>
    %144 = arith.divf %142, %143 : vector<8x2xf32>
    %145 = arith.mulf %139, %144 : vector<8x2xf32>
    %146 = vector.broadcast %111 : f32 to vector<8x2xf32>
    %147 = arith.mulf %145, %146 : vector<8x2xf32>
    %c0_85 = arith.constant 0 : index
    %c1_86 = arith.constant 1 : index
    %c0_87 = arith.constant 0 : index
    %c0_88 = arith.constant 0 : index
    %c0_89 = arith.constant 0 : index
    %148 = vector.load %arg11[%c0_85, %c1_86, %c0_87, %c0_88, %c0_89] : memref<2x2x3x9x2xf32, #tpu.memory_space<vmem>>, vector<1x1x1x8x2xf32>
    %149 = vector.shape_cast %148 : vector<1x1x1x8x2xf32> to vector<8x2xf32>
    %150 = vector.shape_cast %130 : vector<8x2xf32> to vector<1x1x1x8x2xf32>
    tpu.vector_store %arg11[%c0_85, %c1_86, %c0_87, %c0_88, %c0_89], %150 {strides = array<i32>} : memref<2x2x3x9x2xf32, #tpu.memory_space<vmem>>, vector<1x1x1x8x2xf32>,
    %cst_90 = arith.constant 0.000000e+00 : f32
    %151 = vector.broadcast %cst_90 : f32 to vector<1x2xf32>
    %152 = tpu.concatenate %151, %147 in 0 : vector<1x2xf32>, vector<8x2xf32> -> vector<9x2xf32>
    %c0_91 = arith.constant 0 : index
    %c0_92 = arith.constant 0 : index
    %c0_93 = arith.constant 0 : index
    %c0_94 = arith.constant 0 : index
    %c0_95 = arith.constant 0 : index
    %153 = vector.load %arg11[%c0_91, %c0_92, %c0_93, %c0_94, %c0_95] : memref<2x2x3x9x2xf32, #tpu.memory_space<vmem>>, vector<1x1x1x9x2xf32>
    %154 = vector.shape_cast %153 : vector<1x1x1x9x2xf32> to vector<9x2xf32>
    %155 = vector.shape_cast %152 : vector<9x2xf32> to vector<1x1x1x9x2xf32>
    tpu.vector_store %arg11[%c0_91, %c0_92, %c0_93, %c0_94, %c0_95], %155 {strides = array<i32>} : memref<2x2x3x9x2xf32, #tpu.memory_space<vmem>>, vector<1x1x1x9x2xf32>,
    %cst_96 = arith.constant 0.000000e+00 : f32
    %156 = vector.broadcast %cst_96 : f32 to vector<16x2xf32>
    %c0_97 = arith.constant 0 : index
    %c0_98 = arith.constant 0 : index
    %c0_99 = arith.constant 0 : index
    %c0_100 = arith.constant 0 : index
    %c0_101 = arith.constant 0 : index
    %157 = vector.load %arg11[%c0_97, %c0_98, %c0_99, %c0_100, %c0_101] : memref<2x2x3x9x2xf32, #tpu.memory_space<vmem>>, vector<1x1x2x8x2xf32>
    %158 = vector.shape_cast %157 : vector<1x1x2x8x2xf32> to vector<2x8x2xf32>
    %159 = vector.shape_cast %158 : vector<2x8x2xf32> to vector<16x2xf32>
    %c0_102 = arith.constant 0 : index
    %c0_103 = arith.constant 0 : index
    %c0_104 = arith.constant 0 : index
    %160 = vector.load %arg8[%c0_102, %c0_103, %c0_104] : memref<9x2x2xf32, #tpu.memory_space<vmem>>, vector<1x2x2xf32>
    %161 = vector.shape_cast %160 : vector<1x2x2xf32> to vector<2x2xf32>
    %cst_105 = arith.constant dense<0.000000e+00> : vector<16x2xf32>
    %162 = tpu.matmul %159, %161, %cst_105 {dimension_numbers = #tpu.dot_dimension_numbers<[1], [0], [0], [1], [0, 0, 1, 1], [], []>} : vector<16x2xf32>, vector<2x2xf32>, vector<16x2xf32> -> vector<16x2xf32>
    %163 = arith.addf %156, %162 : vector<16x2xf32>
    %c0_106 = arith.constant 0 : index
    %c1_107 = arith.constant 1 : index
    %c0_108 = arith.constant 0 : index
    %c0_109 = arith.constant 0 : index
    %c0_110 = arith.constant 0 : index
    %164 = vector.load %arg11[%c0_106, %c1_107, %c0_108, %c0_109, %c0_110] : memref<2x2x3x9x2xf32, #tpu.memory_space<vmem>>, vector<1x1x2x8x2xf32>
    %165 = vector.shape_cast %164 : vector<1x1x2x8x2xf32> to vector<2x8x2xf32>
    %166 = vector.shape_cast %165 : vector<2x8x2xf32> to vector<16x2xf32>
    %c1_111 = arith.constant 1 : index
    %c0_112 = arith.constant 0 : index
    %c0_113 = arith.constant 0 : index
    %167 = vector.load %arg8[%c1_111, %c0_112, %c0_113] : memref<9x2x2xf32, #tpu.memory_space<vmem>>, vector<1x2x2xf32>
    %168 = vector.shape_cast %167 : vector<1x2x2xf32> to vector<2x2xf32>
    %cst_114 = arith.constant dense<0.000000e+00> : vector<16x2xf32>
    %169 = tpu.matmul %166, %168, %cst_114 {dimension_numbers = #tpu.dot_dimension_numbers<[1], [0], [0], [1], [0, 0, 1, 1], [], []>} : vector<16x2xf32>, vector<2x2xf32>, vector<16x2xf32> -> vector<16x2xf32>
    %170 = arith.addf %163, %169 : vector<16x2xf32>
    %c0_115 = arith.constant 0 : index
    %c0_116 = arith.constant 0 : index
    %c0_117 = arith.constant 0 : index
    %c1_118 = arith.constant 1 : index
    %c0_119 = arith.constant 0 : index
    %171 = vector.load %arg11[%c0_115, %c0_116, %c0_117, %c1_118, %c0_119] : memref<2x2x3x9x2xf32, #tpu.memory_space<vmem>>, vector<1x1x2x8x2xf32>
    %172 = vector.shape_cast %171 : vector<1x1x2x8x2xf32> to vector<2x8x2xf32>
    %173 = vector.shape_cast %172 : vector<2x8x2xf32> to vector<16x2xf32>
    %c2 = arith.constant 2 : index
    %c0_120 = arith.constant 0 : index
    %c0_121 = arith.constant 0 : index
    %174 = vector.load %arg8[%c2, %c0_120, %c0_121] : memref<9x2x2xf32, #tpu.memory_space<vmem>>, vector<1x2x2xf32>
    %175 = vector.shape_cast %174 : vector<1x2x2xf32> to vector<2x2xf32>
    %cst_122 = arith.constant dense<0.000000e+00> : vector<16x2xf32>
    %176 = tpu.matmul %173, %175, %cst_122 {dimension_numbers = #tpu.dot_dimension_numbers<[1], [0], [0], [1], [0, 0, 1, 1], [], []>} : vector<16x2xf32>, vector<2x2xf32>, vector<16x2xf32> -> vector<16x2xf32>
    %177 = arith.addf %170, %176 : vector<16x2xf32>
    %c1_123 = arith.constant 1 : index
    %c0_124 = arith.constant 0 : index
    %c0_125 = arith.constant 0 : index
    %c0_126 = arith.constant 0 : index
    %c0_127 = arith.constant 0 : index
    %178 = vector.load %arg11[%c1_123, %c0_124, %c0_125, %c0_126, %c0_127] : memref<2x2x3x9x2xf32, #tpu.memory_space<vmem>>, vector<1x1x2x8x2xf32>
    %179 = vector.shape_cast %178 : vector<1x1x2x8x2xf32> to vector<2x8x2xf32>
    %180 = vector.shape_cast %179 : vector<2x8x2xf32> to vector<16x2xf32>
    %c3 = arith.constant 3 : index
    %c0_128 = arith.constant 0 : index
    %c0_129 = arith.constant 0 : index
    %181 = vector.load %arg8[%c3, %c0_128, %c0_129] : memref<9x2x2xf32, #tpu.memory_space<vmem>>, vector<1x2x2xf32>
    %182 = vector.shape_cast %181 : vector<1x2x2xf32> to vector<2x2xf32>
    %cst_130 = arith.constant dense<0.000000e+00> : vector<16x2xf32>
    %183 = tpu.matmul %180, %182, %cst_130 {dimension_numbers = #tpu.dot_dimension_numbers<[1], [0], [0], [1], [0, 0, 1, 1], [], []>} : vector<16x2xf32>, vector<2x2xf32>, vector<16x2xf32> -> vector<16x2xf32>
    %184 = arith.addf %177, %183 : vector<16x2xf32>
    %c1_131 = arith.constant 1 : index
    %c1_132 = arith.constant 1 : index
    %c0_133 = arith.constant 0 : index
    %c0_134 = arith.constant 0 : index
    %c0_135 = arith.constant 0 : index
    %185 = vector.load %arg11[%c1_131, %c1_132, %c0_133, %c0_134, %c0_135] : memref<2x2x3x9x2xf32, #tpu.memory_space<vmem>>, vector<1x1x2x8x2xf32>
    %186 = vector.shape_cast %185 : vector<1x1x2x8x2xf32> to vector<2x8x2xf32>
    %187 = vector.shape_cast %186 : vector<2x8x2xf32> to vector<16x2xf32>
    %c4 = arith.constant 4 : index
    %c0_136 = arith.constant 0 : index
    %c0_137 = arith.constant 0 : index
    %188 = vector.load %arg8[%c4, %c0_136, %c0_137] : memref<9x2x2xf32, #tpu.memory_space<vmem>>, vector<1x2x2xf32>
    %189 = vector.shape_cast %188 : vector<1x2x2xf32> to vector<2x2xf32>
    %cst_138 = arith.constant dense<0.000000e+00> : vector<16x2xf32>
    %190 = tpu.matmul %187, %189, %cst_138 {dimension_numbers = #tpu.dot_dimension_numbers<[1], [0], [0], [1], [0, 0, 1, 1], [], []>} : vector<16x2xf32>, vector<2x2xf32>, vector<16x2xf32> -> vector<16x2xf32>
    %191 = arith.addf %184, %190 : vector<16x2xf32>
    %c1_139 = arith.constant 1 : index
    %c0_140 = arith.constant 0 : index
    %c0_141 = arith.constant 0 : index
    %c1_142 = arith.constant 1 : index
    %c0_143 = arith.constant 0 : index
    %192 = vector.load %arg11[%c1_139, %c0_140, %c0_141, %c1_142, %c0_143] : memref<2x2x3x9x2xf32, #tpu.memory_space<vmem>>, vector<1x1x2x8x2xf32>
    %193 = vector.shape_cast %192 : vector<1x1x2x8x2xf32> to vector<2x8x2xf32>
    %194 = vector.shape_cast %193 : vector<2x8x2xf32> to vector<16x2xf32>
    %c5 = arith.constant 5 : index
    %c0_144 = arith.constant 0 : index
    %c0_145 = arith.constant 0 : index
    %195 = vector.load %arg8[%c5, %c0_144, %c0_145] : memref<9x2x2xf32, #tpu.memory_space<vmem>>, vector<1x2x2xf32>
    %196 = vector.shape_cast %195 : vector<1x2x2xf32> to vector<2x2xf32>
    %cst_146 = arith.constant dense<0.000000e+00> : vector<16x2xf32>
    %197 = tpu.matmul %194, %196, %cst_146 {dimension_numbers = #tpu.dot_dimension_numbers<[1], [0], [0], [1], [0, 0, 1, 1], [], []>} : vector<16x2xf32>, vector<2x2xf32>, vector<16x2xf32> -> vector<16x2xf32>
    %198 = arith.addf %191, %197 : vector<16x2xf32>
    %c0_147 = arith.constant 0 : index
    %c0_148 = arith.constant 0 : index
    %c1_149 = arith.constant 1 : index
    %c0_150 = arith.constant 0 : index
    %c0_151 = arith.constant 0 : index
    %199 = vector.load %arg11[%c0_147, %c0_148, %c1_149, %c0_150, %c0_151] : memref<2x2x3x9x2xf32, #tpu.memory_space<vmem>>, vector<1x1x2x8x2xf32>
    %200 = vector.shape_cast %199 : vector<1x1x2x8x2xf32> to vector<2x8x2xf32>
    %201 = vector.shape_cast %200 : vector<2x8x2xf32> to vector<16x2xf32>
    %c6 = arith.constant 6 : index
    %c0_152 = arith.constant 0 : index
    %c0_153 = arith.constant 0 : index
    %202 = vector.load %arg8[%c6, %c0_152, %c0_153] : memref<9x2x2xf32, #tpu.memory_space<vmem>>, vector<1x2x2xf32>
    %203 = vector.shape_cast %202 : vector<1x2x2xf32> to vector<2x2xf32>
    %cst_154 = arith.constant dense<0.000000e+00> : vector<16x2xf32>
    %204 = tpu.matmul %201, %203, %cst_154 {dimension_numbers = #tpu.dot_dimension_numbers<[1], [0], [0], [1], [0, 0, 1, 1], [], []>} : vector<16x2xf32>, vector<2x2xf32>, vector<16x2xf32> -> vector<16x2xf32>
    %205 = arith.addf %198, %204 : vector<16x2xf32>
    %c0_155 = arith.constant 0 : index
    %c1_156 = arith.constant 1 : index
    %c1_157 = arith.constant 1 : index
    %c0_158 = arith.constant 0 : index
    %c0_159 = arith.constant 0 : index
    %206 = vector.load %arg11[%c0_155, %c1_156, %c1_157, %c0_158, %c0_159] : memref<2x2x3x9x2xf32, #tpu.memory_space<vmem>>, vector<1x1x2x8x2xf32>
    %207 = vector.shape_cast %206 : vector<1x1x2x8x2xf32> to vector<2x8x2xf32>
    %208 = vector.shape_cast %207 : vector<2x8x2xf32> to vector<16x2xf32>
    %c7 = arith.constant 7 : index
    %c0_160 = arith.constant 0 : index
    %c0_161 = arith.constant 0 : index
    %209 = vector.load %arg8[%c7, %c0_160, %c0_161] : memref<9x2x2xf32, #tpu.memory_space<vmem>>, vector<1x2x2xf32>
    %210 = vector.shape_cast %209 : vector<1x2x2xf32> to vector<2x2xf32>
    %cst_162 = arith.constant dense<0.000000e+00> : vector<16x2xf32>
    %211 = tpu.matmul %208, %210, %cst_162 {dimension_numbers = #tpu.dot_dimension_numbers<[1], [0], [0], [1], [0, 0, 1, 1], [], []>} : vector<16x2xf32>, vector<2x2xf32>, vector<16x2xf32> -> vector<16x2xf32>
    %212 = arith.addf %205, %211 : vector<16x2xf32>
    %c0_163 = arith.constant 0 : index
    %c0_164 = arith.constant 0 : index
    %c1_165 = arith.constant 1 : index
    %c1_166 = arith.constant 1 : index
    %c0_167 = arith.constant 0 : index
    %213 = vector.load %arg11[%c0_163, %c0_164, %c1_165, %c1_166, %c0_167] : memref<2x2x3x9x2xf32, #tpu.memory_space<vmem>>, vector<1x1x2x8x2xf32>
    %214 = vector.shape_cast %213 : vector<1x1x2x8x2xf32> to vector<2x8x2xf32>
    %215 = vector.shape_cast %214 : vector<2x8x2xf32> to vector<16x2xf32>
    %c8 = arith.constant 8 : index
    %c0_168 = arith.constant 0 : index
    %c0_169 = arith.constant 0 : index
    %216 = vector.load %arg8[%c8, %c0_168, %c0_169] : memref<9x2x2xf32, #tpu.memory_space<vmem>>, vector<1x2x2xf32>
    %217 = vector.shape_cast %216 : vector<1x2x2xf32> to vector<2x2xf32>
    %cst_170 = arith.constant dense<0.000000e+00> : vector<16x2xf32>
    %218 = tpu.matmul %215, %217, %cst_170 {dimension_numbers = #tpu.dot_dimension_numbers<[1], [0], [0], [1], [0, 0, 1, 1], [], []>} : vector<16x2xf32>, vector<2x2xf32>, vector<16x2xf32> -> vector<16x2xf32>
    %219 = arith.addf %212, %218 : vector<16x2xf32>
    %c0_171 = arith.constant 0 : index
    %c0_172 = arith.constant 0 : index
    %220 = vector.load %arg9[%c0_171, %c0_172] : memref<2x2xf32, #tpu.memory_space<vmem>>, vector<1x2xf32>
    %221 = vector.broadcast %220 : vector<1x2xf32> to vector<16x2xf32>
    %222 = arith.mulf %219, %221 : vector<16x2xf32>
    %c1_173 = arith.constant 1 : index
    %c0_174 = arith.constant 0 : index
    %223 = vector.load %arg9[%c1_173, %c0_174] : memref<2x2xf32, #tpu.memory_space<vmem>>, vector<1x2xf32>
    %224 = vector.broadcast %223 : vector<1x2xf32> to vector<16x2xf32>
    %225 = arith.addf %222, %224 : vector<16x2xf32>
    %226 = arith.negf %225 : vector<16x2xf32>
    %227 = math.exp %226 : vector<16x2xf32>
    %cst_175 = arith.constant 1.000000e+00 : f32
    %228 = vector.broadcast %cst_175 : f32 to vector<16x2xf32>
    %229 = arith.addf %228, %227 : vector<16x2xf32>
    %230 = arith.divf %228, %229 : vector<16x2xf32>
    %231 = arith.mulf %225, %230 : vector<16x2xf32>
    %232 = vector.shape_cast %231 : vector<16x2xf32> to vector<2x8x2xf32>
    %233 = tpu.concatenate %28, %232 in 2 : vector<2x8x2xf32>, vector<2x8x2xf32> -> vector<2x8x4xf32>
    %c0_176 = arith.constant 0 : index
    %c0_177 = arith.constant 0 : index
    %c0_178 = arith.constant 0 : index
    %c0_179 = arith.constant 0 : index
    %234 = vector.load %arg10[%c0_176, %c0_177, %c0_178, %c0_179] : memref<1x2x8x4xf32, #tpu.memory_space<vmem>>, vector<1x2x8x4xf32>
    %235 = vector.shape_cast %234 : vector<1x2x8x4xf32> to vector<2x8x4xf32>
    %236 = vector.shape_cast %233 : vector<2x8x4xf32> to vector<1x2x8x4xf32>
    tpu.vector_store %arg10[%c0_176, %c0_177, %c0_178, %c0_179], %236 {strides = array<i32>} : memref<1x2x8x4xf32, #tpu.memory_space<vmem>>, vector<1x2x8x4xf32>,
    return
  }
  func.func @transform_0(%arg0: i32, %arg1: i32) -> (i32, i32, i32, i32, i32) {
    %c0_i32 = arith.constant 0 : i32
    %c0_i32_0 = arith.constant 0 : i32
    %c0_i32_1 = arith.constant 0 : i32
    %c0_i32_2 = arith.constant 0 : i32
    return %arg0, %arg1, %c0_i32, %c0_i32_0, %c0_i32_1 : i32, i32, i32, i32, i32
  }
  func.func @transform_1(%arg0: i32, %arg1: i32) -> (i32, i32, i32, i32, i32) {
    %c2_i32 = arith.constant 2 : i32
    %0 = arith.muli %arg1, %c2_i32 : i32
    %c1_i32 = arith.constant 1 : i32
    %1 = arith.subi %0, %c1_i32 : i32
    %c0_i32 = arith.constant 0 : i32
    %2 = arith.maxsi %1, %c0_i32 : i32
    %c0_i32_0 = arith.constant 0 : i32
    %c0_i32_1 = arith.constant 0 : i32
    %c0_i32_2 = arith.constant 0 : i32
    %c0_i32_3 = arith.constant 0 : i32
    return %arg0, %2, %c0_i32_0, %c0_i32_1, %c0_i32_2 : i32, i32, i32, i32, i32
  }
  func.func @transform_2(%arg0: i32, %arg1: i32) -> (i32, i32) {
    %c0_i32 = arith.constant 0 : i32
    %c0_i32_0 = arith.constant 0 : i32
    %c0_i32_1 = arith.constant 0 : i32
    return %c0_i32, %c0_i32_0 : i32, i32
  }
  func.func @transform_3(%arg0: i32, %arg1: i32) -> (i32, i32) {
    %c0_i32 = arith.constant 0 : i32
    %c0_i32_0 = arith.constant 0 : i32
    %c0_i32_1 = arith.constant 0 : i32
    return %c0_i32, %c0_i32_0 : i32, i32
  }
  func.func @transform_4(%arg0: i32, %arg1: i32) -> (i32, i32) {
    %c0_i32 = arith.constant 0 : i32
    %c0_i32_0 = arith.constant 0 : i32
    %c0_i32_1 = arith.constant 0 : i32
    return %c0_i32, %c0_i32_0 : i32, i32
  }
  func.func @transform_5(%arg0: i32, %arg1: i32) -> (i32, i32) {
    %c0_i32 = arith.constant 0 : i32
    %c0_i32_0 = arith.constant 0 : i32
    %c0_i32_1 = arith.constant 0 : i32
    return %c0_i32, %c0_i32_0 : i32, i32
  }
  func.func @transform_6(%arg0: i32, %arg1: i32) -> (i32, i32, i32) {
    %c0_i32 = arith.constant 0 : i32
    %c0_i32_0 = arith.constant 0 : i32
    %c0_i32_1 = arith.constant 0 : i32
    %c0_i32_2 = arith.constant 0 : i32
    return %c0_i32, %c0_i32_0, %c0_i32_1 : i32, i32, i32
  }
  func.func @transform_7(%arg0: i32, %arg1: i32) -> (i32, i32) {
    %c0_i32 = arith.constant 0 : i32
    %c0_i32_0 = arith.constant 0 : i32
    %c0_i32_1 = arith.constant 0 : i32
    return %c0_i32, %c0_i32_0 : i32, i32
  }
  func.func @transform_8(%arg0: i32, %arg1: i32) -> (i32, i32, i32, i32) {
    %c0_i32 = arith.constant 0 : i32
    %c0_i32_0 = arith.constant 0 : i32
    %c0_i32_1 = arith.constant 0 : i32
    return %arg0, %arg1, %c0_i32, %c0_i32_0 : i32, i32, i32, i32
  }
}

</mosaic_0001>

<llo_original>
// kernel: tpu_custom_call.1
$region0: #{tpu_custom_call.1}
  #allocation0 [shape = 'u32[]', space=smem, size = 0x4, offset = 0x4, fixed_abs, tag = 'smem constant byte address 0x4 - core index']
  #allocation1 [shape = 'u32[144,128]{1,0:T(1,128)}', space=vmem, size = 0x12000, scoped, tag = 'internal scratch']
  #allocation2 [shape = 'f32[2,2,3,9,2]{4,3,2,1,0:T(8,128)}', space=vmem, size = 0x18000, scoped, tag = 'scratch operand']
  %s0 = inlined_call_operand.hbm [shape: f32[2,8,2,8,8], index: 0, kind: input, shape index: {}]
  %s1 = inlined_call_operand.hbm [shape: f32[2,8,2,8,8], index: 1, kind: input, shape index: {}]
  %s2 = inlined_call_operand.vmem [shape: f32[4,2], index: 2, kind: input, shape index: {}]
  %s3 = inlined_call_operand.vmem [shape: f32[2,2], index: 3, kind: input, shape index: {}]
  %s4 = inlined_call_operand.vmem [shape: f32[4,2], index: 4, kind: input, shape index: {}]
  %s5 = inlined_call_operand.vmem [shape: f32[2,2], index: 5, kind: input, shape index: {}]
  %s6 = inlined_call_operand.vmem [shape: f32[9,2,2], index: 6, kind: input, shape index: {}]
  %s7 = inlined_call_operand.vmem [shape: f32[2,2], index: 7, kind: input, shape index: {}]
  %s8 = inlined_call_operand.vmem [shape: f32[2,8,8,4], index: 8, kind: output, shape index: {}]
  %s9 = sld [smem:[#allocation0]]
  $region73: #{tpu_custom_call.1} parent=0
    _
  %s11 = ssub.s32 1, %s9
  %s12 = scalar_select 0, %s11, %s9
  $region1: #{tpu_custom_call.1} parent=0
    #allocation3 [shape = 'u8[32768]{0}', space=vmem, size = 0x8000, scoped, tag = 'input window, operand 0']
    #allocation4 [shape = 's32[2]{0}', space=sflag, size = 0x8, scoped, tag = 'scoped memory for tpu_custom_call.1']
    #allocation5 [shape = 'u8[16384]{0}', space=vmem, size = 0x4000, scoped, tag = 'input window, operand 1']
    #allocation6 [shape = 's32[2]{0}', space=sflag, size = 0x8, scoped, tag = 'scoped memory for tpu_custom_call.1']
    %13 = vsyncpa [#allocation4], 0
    %s14 = scalar_lea.sflag [#allocation4], 1
    %15 = vsyncpa %s14, 0
    %16 = vsyncpa [#allocation6], 0
    %s17 = scalar_lea.sflag [#allocation6], 1
    %18 = vsyncpa %s17, 0
    loop: start=0, step=1, limit=10
    $region2: #{tpu_custom_call.1} parent=1 // loop_pre_header
      _
    $region3: #{tpu_custom_call.1} parent=1 // loop_header
      %s20 = sphi 0, %s24
      %p21 = scmp.ge.s32.totalorder %s20, 10
      %s27 = sphi 0, %s39
      %s28 = sphi 0, %s35
      %s29 = sphi 0, %s27
      %s30 = sphi 0, %s28
      %s31 = sphi 0, %s29
      %s32 = sphi 0, %s30
      %s44 = sphi 0, %s46
      %s47 = sphi 0, %s44
      %s48 = sphi 0, %s47
      %s64 = sphi 0, %s48
      %s80 = sphi 0, %s82
      %s83 = sphi 0, %s80
      %s84 = sphi 0, %s83
      %s100 = sphi 0, %s84
      %s104 = sphi 0, %s104
      %s106 = sphi 0, %s104
      %s107 = sphi 0, %s106
      %s121 = sphi 0, %s107
      %s125 = sphi 0, %s125
      %s127 = sphi 0, %s125
      %s128 = sphi 0, %s127
      %s142 = sphi 0, %s128
      %s146 = sphi 0, %s146
      %s148 = sphi 0, %s146
      %s149 = sphi 0, %s148
      %s163 = sphi 0, %s149
      %s167 = sphi 0, %s167
      %s169 = sphi 0, %s167
      %s170 = sphi 0, %s169
      %s184 = sphi 0, %s170
      %s188 = sphi 0, %s188
      %s190 = sphi 0, %s188
      %s191 = sphi 0, %s190
      %s205 = sphi 0, %s191
      %s209 = sphi 0, %s209
      %s211 = sphi 0, %s209
      %s212 = sphi 0, %s211
      %s226 = sphi 0, %s212
      %s234 = sphi 0, %s236
      %s237 = sphi 0, %s234
      %s238 = sphi 0, %s237
      %s254 = sphi 0, %s238
    $region4: #{tpu_custom_call.1} parent=1 // loop_header_branch
      %23 = sbr.rel (%p21) target = $region8
    $region5: #{tpu_custom_call.1} parent=1 // loop_body
      %s25 = ssub.s32 %s20, 1
      %s26 = ssub.s32 %s20, 2
      %s33 = sadd.s32 1, %s28
      %p34 = scmp.ge.s32.totalorder %s33, 4
      %s35 = scalar_select %p34, 0, %s33
      %s36 = sadd.s32 1, %s27
      %s37 = scalar_select %p34, %s36, %s27
      %p38 = scmp.ge.s32.totalorder %s37, 2
      %s39 = scalar_select %p38, 0, %s37
      %s40 = ssub.s32 %s27, %s39
      %s41 = ssub.s32 %s28, %s35
      %s42 = sor.u32 %s40, %s41
      %p43 = scmp.eq.s32.totalorder %s42, 0
      %s45 = sadd.s32 %s44, 1
      %s46 = scalar_select %p43, %s44, %s45
      %p49 = pneg %p43
      %p50 = scmp.eq.s32.totalorder %s20, 7
      %p51 = por %p49, %p50
      %p52 = scmp.ne.s32.totalorder %s44, %s47
      %p53 = scmp.eq.s32.totalorder %s20, 0
      %p54 = por %p52, %p53
      %p55 = scmp.ne.s32.totalorder %s44, %s47
      %p56 = scmp.eq.s32.totalorder %s25, 7
      %p57 = por %p55, %p56
      %p58 = scmp.ne.s32.totalorder %s47, %s48
      %p59 = scmp.eq.s32.totalorder %s25, 0
      %p60 = por %p58, %p59
      %p61 = scmp.ne.s32.totalorder %s47, %s48
      %p62 = scmp.eq.s32.totalorder %s26, 7
      %p63 = por %p61, %p62
      %p65 = scmp.ne.s32.totalorder %s48, %s64
      %p66 = scmp.eq.s32.totalorder %s26, 0
      %p67 = por %p65, %p66
      %s68 = smul.u32 %s28, 2
      %s69 = ssub.s32 %s68, 1
      %p70 = scmp.gt.s32.totalorder %s69, 0
      %s71 = scalar_select %p70, %s69, 0
      %s72 = smul.u32 %s35, 2
      %s73 = ssub.s32 %s72, 1
      %p74 = scmp.gt.s32.totalorder %s73, 0
      %s75 = scalar_select %p74, %s73, 0
      %s76 = ssub.s32 %s27, %s39
      %s77 = ssub.s32 %s71, %s75
      %s78 = sor.u32 %s76, %s77
      %p79 = scmp.eq.s32.totalorder %s78, 0
      %s81 = sadd.s32 %s80, 1
      %s82 = scalar_select %p79, %s80, %s81
      %p85 = pneg %p79
      %p86 = scmp.eq.s32.totalorder %s20, 7
      %p87 = por %p85, %p86
      %p88 = scmp.ne.s32.totalorder %s80, %s83
      %p89 = scmp.eq.s32.totalorder %s20, 0
      %p90 = por %p88, %p89
      %p91 = scmp.ne.s32.totalorder %s80, %s83
      %p92 = scmp.eq.s32.totalorder %s25, 7
      %p93 = por %p91, %p92
      %p94 = scmp.ne.s32.totalorder %s83, %s84
      %p95 = scmp.eq.s32.totalorder %s25, 0
      %p96 = por %p94, %p95
      %p97 = scmp.ne.s32.totalorder %s83, %s84
      %p98 = scmp.eq.s32.totalorder %s26, 7
      %p99 = por %p97, %p98
      %p101 = scmp.ne.s32.totalorder %s84, %s100
      %p102 = scmp.eq.s32.totalorder %s26, 0
      %p103 = por %p101, %p102
      %s105 = sadd.s32 %s104, 1
      %p108 = scmp.eq.s32.totalorder %s20, 7
      %p109 = scmp.ne.s32.totalorder %s104, %s106
      %p110 = scmp.eq.s32.totalorder %s20, 0
      %p111 = por %p109, %p110
      %p112 = scmp.ne.s32.totalorder %s104, %s106
      %p113 = scmp.eq.s32.totalorder %s25, 7
      %p114 = por %p112, %p113
      %p115 = scmp.ne.s32.totalorder %s106, %s107
      %p116 = scmp.eq.s32.totalorder %s25, 0
      %p117 = por %p115, %p116
      %p118 = scmp.ne.s32.totalorder %s106, %s107
      %p119 = scmp.eq.s32.totalorder %s26, 7
      %p120 = por %p118, %p119
      %p122 = scmp.ne.s32.totalorder %s107, %s121
      %p123 = scmp.eq.s32.totalorder %s26, 0
      %p124 = por %p122, %p123
      %s126 = sadd.s32 %s125, 1
      %p129 = scmp.eq.s32.totalorder %s20, 7
      %p130 = scmp.ne.s32.totalorder %s125, %s127
      %p131 = scmp.eq.s32.totalorder %s20, 0
      %p132 = por %p130, %p131
      %p133 = scmp.ne.s32.totalorder %s125, %s127
      %p134 = scmp.eq.s32.totalorder %s25, 7
      %p135 = por %p133, %p134
      %p136 = scmp.ne.s32.totalorder %s127, %s128
      %p137 = scmp.eq.s32.totalorder %s25, 0
      %p138 = por %p136, %p137
      %p139 = scmp.ne.s32.totalorder %s127, %s128
      %p140 = scmp.eq.s32.totalorder %s26, 7
      %p141 = por %p139, %p140
      %p143 = scmp.ne.s32.totalorder %s128, %s142
      %p144 = scmp.eq.s32.totalorder %s26, 0
      %p145 = por %p143, %p144
      %s147 = sadd.s32 %s146, 1
      %p150 = scmp.eq.s32.totalorder %s20, 7
      %p151 = scmp.ne.s32.totalorder %s146, %s148
      %p152 = scmp.eq.s32.totalorder %s20, 0
      %p153 = por %p151, %p152
      %p154 = scmp.ne.s32.totalorder %s146, %s148
      %p155 = scmp.eq.s32.totalorder %s25, 7
      %p156 = por %p154, %p155
      %p157 = scmp.ne.s32.totalorder %s148, %s149
      %p158 = scmp.eq.s32.totalorder %s25, 0
      %p159 = por %p157, %p158
      %p160 = scmp.ne.s32.totalorder %s148, %s149
      %p161 = scmp.eq.s32.totalorder %s26, 7
      %p162 = por %p160, %p161
      %p164 = scmp.ne.s32.totalorder %s149, %s163
      %p165 = scmp.eq.s32.totalorder %s26, 0
      %p166 = por %p164, %p165
      %s168 = sadd.s32 %s167, 1
      %p171 = scmp.eq.s32.totalorder %s20, 7
      %p172 = scmp.ne.s32.totalorder %s167, %s169
      %p173 = scmp.eq.s32.totalorder %s20, 0
      %p174 = por %p172, %p173
      %p175 = scmp.ne.s32.totalorder %s167, %s169
      %p176 = scmp.eq.s32.totalorder %s25, 7
      %p177 = por %p175, %p176
      %p178 = scmp.ne.s32.totalorder %s169, %s170
      %p179 = scmp.eq.s32.totalorder %s25, 0
      %p180 = por %p178, %p179
      %p181 = scmp.ne.s32.totalorder %s169, %s170
      %p182 = scmp.eq.s32.totalorder %s26, 7
      %p183 = por %p181, %p182
      %p185 = scmp.ne.s32.totalorder %s170, %s184
      %p186 = scmp.eq.s32.totalorder %s26, 0
      %p187 = por %p185, %p186
      %s189 = sadd.s32 %s188, 1
      %p192 = scmp.eq.s32.totalorder %s20, 7
      %p193 = scmp.ne.s32.totalorder %s188, %s190
      %p194 = scmp.eq.s32.totalorder %s20, 0
      %p195 = por %p193, %p194
      %p196 = scmp.ne.s32.totalorder %s188, %s190
      %p197 = scmp.eq.s32.totalorder %s25, 7
      %p198 = por %p196, %p197
      %p199 = scmp.ne.s32.totalorder %s190, %s191
      %p200 = scmp.eq.s32.totalorder %s25, 0
      %p201 = por %p199, %p200
      %p202 = scmp.ne.s32.totalorder %s190, %s191
      %p203 = scmp.eq.s32.totalorder %s26, 7
      %p204 = por %p202, %p203
      %p206 = scmp.ne.s32.totalorder %s191, %s205
      %p207 = scmp.eq.s32.totalorder %s26, 0
      %p208 = por %p206, %p207
      %s210 = sadd.s32 %s209, 1
      %p213 = scmp.eq.s32.totalorder %s20, 7
      %p214 = scmp.ne.s32.totalorder %s209, %s211
      %p215 = scmp.eq.s32.totalorder %s20, 0
      %p216 = por %p214, %p215
      %p217 = scmp.ne.s32.totalorder %s209, %s211
      %p218 = scmp.eq.s32.totalorder %s25, 7
      %p219 = por %p217, %p218
      %p220 = scmp.ne.s32.totalorder %s211, %s212
      %p221 = scmp.eq.s32.totalorder %s25, 0
      %p222 = por %p220, %p221
      %p223 = scmp.ne.s32.totalorder %s211, %s212
      %p224 = scmp.eq.s32.totalorder %s26, 7
      %p225 = por %p223, %p224
      %p227 = scmp.ne.s32.totalorder %s212, %s226
      %p228 = scmp.eq.s32.totalorder %s26, 0
      %p229 = por %p227, %p228
      %s230 = ssub.s32 %s27, %s39
      %s231 = ssub.s32 %s28, %s35
      %s232 = sor.u32 %s230, %s231
      %p233 = scmp.eq.s32.totalorder %s232, 0
      %s235 = sadd.s32 %s234, 1
      %s236 = scalar_select %p233, %s234, %s235
      %p239 = pneg %p233
      %p240 = scmp.eq.s32.totalorder %s20, 7
      %p241 = por %p239, %p240
      %p242 = scmp.ne.s32.totalorder %s234, %s237
      %p243 = scmp.eq.s32.totalorder %s20, 0
      %p244 = por %p242, %p243
      %p245 = scmp.ne.s32.totalorder %s234, %s237
      %p246 = scmp.eq.s32.totalorder %s25, 7
      %p247 = por %p245, %p246
      %p248 = scmp.ne.s32.totalorder %s237, %s238
      %p249 = scmp.eq.s32.totalorder %s25, 0
      %p250 = por %p248, %p249
      %p251 = scmp.ne.s32.totalorder %s237, %s238
      %p252 = scmp.eq.s32.totalorder %s26, 7
      %p253 = por %p251, %p252
      %p255 = scmp.ne.s32.totalorder %s238, %s254
      %p256 = scmp.eq.s32.totalorder %s26, 0
      %p257 = por %p255, %p256
      %p258 = scmp.le.s32.totalorder 1, %s20
      %p259 = scmp.lt.s32.totalorder %s20, 9
      %p260 = pnand %p258, %p259
      %p261 = pneg %p260
      // Predicated region
      $region9: #{tpu_custom_call.1} parent=5 // pred_check
        _
      $region10: #{tpu_custom_call.1} parent=5 // pred_check_branch
        %263 = sbr.rel (%p260) target = $region12
      $region11: #{tpu_custom_call.1} parent=5 // pred_region
        %s264 = ssub.s32 %s20, 1
        // Predicated region
        $region13: #{tpu_custom_call.1} parent=11 // pred_check
          %p265 = pneg %p117
        $region14: #{tpu_custom_call.1} parent=11 // pred_check_branch
          %267 = sbr.rel (%p265) target = $region16
        $region15: #{tpu_custom_call.1} parent=11 // pred_region
          _
        $region16: #{tpu_custom_call.1} parent=11 // pred_fallthru
          _
        // Predicated region
        $region17: #{tpu_custom_call.1} parent=11 // pred_check
          %p268 = pneg %p138
        $region18: #{tpu_custom_call.1} parent=11 // pred_check_branch
          %270 = sbr.rel (%p268) target = $region20
        $region19: #{tpu_custom_call.1} parent=11 // pred_region
          _
        $region20: #{tpu_custom_call.1} parent=11 // pred_fallthru
          _
        // Predicated region
        $region21: #{tpu_custom_call.1} parent=11 // pred_check
          %p271 = pneg %p159
        $region22: #{tpu_custom_call.1} parent=11 // pred_check_branch
          %273 = sbr.rel (%p271) target = $region24
        $region23: #{tpu_custom_call.1} parent=11 // pred_region
          _
        $region24: #{tpu_custom_call.1} parent=11 // pred_fallthru
          _
        // Predicated region
        $region25: #{tpu_custom_call.1} parent=11 // pred_check
          %p274 = pneg %p180
        $region26: #{tpu_custom_call.1} parent=11 // pred_check_branch
          %276 = sbr.rel (%p274) target = $region28
        $region27: #{tpu_custom_call.1} parent=11 // pred_region
          _
        $region28: #{tpu_custom_call.1} parent=11 // pred_fallthru
          _
        // Predicated region
        $region29: #{tpu_custom_call.1} parent=11 // pred_check
          %p277 = pneg %p201
        $region30: #{tpu_custom_call.1} parent=11 // pred_check_branch
          %279 = sbr.rel (%p277) target = $region32
        $region31: #{tpu_custom_call.1} parent=11 // pred_region
          _
        $region32: #{tpu_custom_call.1} parent=11 // pred_fallthru
          _
        // Predicated region
        $region33: #{tpu_custom_call.1} parent=11 // pred_check
          %p280 = pneg %p222
        $region34: #{tpu_custom_call.1} parent=11 // pred_check_branch
          %282 = sbr.rel (%p280) target = $region36
        $region35: #{tpu_custom_call.1} parent=11 // pred_region
          _
        $region36: #{tpu_custom_call.1} parent=11 // pred_fallthru
          _
      $region12: #{tpu_custom_call.1} parent=5 // pred_fallthru
        _
      %p283 = scmp.lt.s32.totalorder %s20, 8
      // Predicated region
      $region37: #{tpu_custom_call.1} parent=5 // pred_check
        %p284 = pneg %p283
      $region38: #{tpu_custom_call.1} parent=5 // pred_check_branch
        %286 = sbr.rel (%p284) target = $region40
      $region39: #{tpu_custom_call.1} parent=5 // pred_region
        // Predicated region
        $region41: #{tpu_custom_call.1} parent=39 // pred_check
          %p287 = pneg %p54
        $region42: #{tpu_custom_call.1} parent=39 // pred_check_branch
          %289 = sbr.rel (%p287) target = $region44
        $region43: #{tpu_custom_call.1} parent=39 // pred_region
          %s290 = sand.u32 %s44, 1
          %s291 = scalar_lea.sflag [#allocation4], %s290
          %s292 = sand.u32 %s44, 1
          %s293 = smul.addr %s292, 32
          %s294 = scalar_lea.vmem [#allocation3], %s293
          %s295 = smul.u32 2, %s28
          %s297 = ssub.s32 512, 512
          %298 = vsyncadd %s291, %s297
          %s299 = smul.addr %s295, 2
          %s300 = smul.addr %s27, 16
          %s301 = sadd.s32 %s299, %s300
          %s302 = smul.addr %s301, 128
          %s303 = scalar_lea.hbm %s0, %s302
          %s304 = sshll.u32 %s294, 4
          %s305 = int_to_ptr.vmem [resolvable:$true] %s304
          %310 = dma.hbm_to_vmem [thread:$0]  %s303, 512, %s305, %s291, 128, 128, 8
        $region44: #{tpu_custom_call.1} parent=39 // pred_fallthru
          _
        // Predicated region
        $region45: #{tpu_custom_call.1} parent=39 // pred_check
          %p311 = pneg %p90
        $region46: #{tpu_custom_call.1} parent=39 // pred_check_branch
          %313 = sbr.rel (%p311) target = $region48
        $region47: #{tpu_custom_call.1} parent=39 // pred_region
          %s314 = sand.u32 %s80, 1
          %s315 = scalar_lea.sflag [#allocation6], %s314
          %s316 = sand.u32 %s80, 1
          %s317 = smul.addr %s316, 16
          %s318 = scalar_lea.vmem [#allocation5], %s317
          %s319 = smul.u32 %s28, 2
          %s320 = ssub.s32 %s319, 1
          %p321 = scmp.gt.s32.totalorder %s320, 0
          %s322 = scalar_select %p321, %s320, 0
          %s324 = ssub.s32 256, 256
          %325 = vsyncadd %s315, %s324
          %s326 = smul.addr %s322, 2
          %s327 = smul.addr %s27, 16
          %s328 = sadd.s32 %s326, %s327
          %s329 = smul.addr %s328, 128
          %s330 = scalar_lea.hbm %s1, %s329
          %s331 = sshll.u32 %s318, 4
          %s332 = int_to_ptr.vmem [resolvable:$true] %s331
          %337 = dma.hbm_to_vmem [thread:$0]  %s330, 256, %s332, %s315, 128, 128, 8
        $region48: #{tpu_custom_call.1} parent=39 // pred_fallthru
          _
      $region40: #{tpu_custom_call.1} parent=5 // pred_fallthru
        _
      %p338 = scmp.le.s32.totalorder 1, %s20
      %p339 = scmp.lt.s32.totalorder %s20, 9
      %p340 = pnand %p338, %p339
      %p341 = pneg %p340
      // Predicated region
      $region49: #{tpu_custom_call.1} parent=5 // pred_check
        _
      $region50: #{tpu_custom_call.1} parent=5 // pred_check_branch
        %343 = sbr.rel (%p340) target = $region52
      $region51: #{tpu_custom_call.1} parent=5 // pred_region
        %s344 = ssub.s32 %s20, 1
        %s345 = sand.u32 %s47, 1
        %s346 = scalar_lea.sflag [#allocation4], %s345
        %s347 = sand.u32 %s47, 1
        %s348 = smul.addr %s347, 32
        %s349 = scalar_lea.vmem [#allocation3], %s348
        // Predicated region
        $region53: #{tpu_custom_call.1} parent=51 // pred_check
          %p350 = pneg %p60
        $region54: #{tpu_custom_call.1} parent=51 // pred_check_branch
          %352 = sbr.rel (%p350) target = $region56
        $region55: #{tpu_custom_call.1} parent=51 // pred_region
          %353 = dma.done %s346, 512
        $region56: #{tpu_custom_call.1} parent=51 // pred_fallthru
          _
        %s354 = sand.u32 %s83, 1
        %s355 = scalar_lea.sflag [#allocation6], %s354
        %s356 = sand.u32 %s83, 1
        %s357 = smul.addr %s356, 16
        %s358 = scalar_lea.vmem [#allocation5], %s357
        // Predicated region
        $region57: #{tpu_custom_call.1} parent=51 // pred_check
          %p359 = pneg %p96
        $region58: #{tpu_custom_call.1} parent=51 // pred_check_branch
          %361 = sbr.rel (%p359) target = $region60
        $region59: #{tpu_custom_call.1} parent=51 // pred_region
          %362 = dma.done %s355, 256
        $region60: #{tpu_custom_call.1} parent=51 // pred_fallthru
          _
        %s363 = sand.u32 %s47, 1
        %s364 = scalar_lea.sflag [#allocation4], %s363
        %s365 = sand.u32 %s47, 1
        %s366 = smul.addr %s365, 32
        %s367 = scalar_lea.vmem [#allocation3], %s366
        %p368 = pneg %p60
        %p369 = pneg %p57
        %s370 = sand.u32 %s83, 1
        %s371 = scalar_lea.sflag [#allocation6], %s370
        %s372 = sand.u32 %s83, 1
        %s373 = smul.addr %s372, 16
        %s374 = scalar_lea.vmem [#allocation5], %s373
        %p375 = pneg %p96
        %p376 = pneg %p93
        %p377 = pneg %p117
        %p378 = pneg %p114
        %p379 = pneg %p138
        %p380 = pneg %p135
        %p381 = pneg %p159
        %p382 = pneg %p156
        %p383 = pneg %p180
        %p384 = pneg %p177
        %p385 = pneg %p201
        %p386 = pneg %p198
        %p387 = pneg %p222
        %p388 = pneg %p219
        %p389 = pneg %p250
        %p390 = pneg %p247
        %s391 = smul.u32 2, %s30
        %p392 = scmp.lt.s32.totalorder %s29, 1
        %s393 = scalar_select %p392, %s29, 1
        %p394 = scmp.lt.s32.totalorder %s391, 7
        %s395 = scalar_select %p394, %s391, 7
        %s396 = smul.addr %s393, 8
        %s397 = sadd.s32 %s395, %s396
        %s398 = smul.addr %s397, 8
        %s399 = scalar_lea.vmem %s8, %s398
        %s400 = smul.u32 2, %s30
        %s401 = smul.u32 %s30, 2
        %s402 = ssub.s32 %s401, 1
        %p403 = scmp.gt.s32.totalorder %s402, 0
        %s404 = scalar_select %p403, %s402, 0
        %s405 = smul.u32 2, %s30
        %p406 = scmp.lt.s32.totalorder %s29, 1
        %s407 = scalar_select %p406, %s29, 1
        %p408 = scmp.lt.s32.totalorder %s405, 7
        %s409 = scalar_select %p408, %s405, 7
        %s410 = smul.addr %s407, 8
        %s411 = sadd.s32 %s409, %s410
        %s412 = smul.addr %s411, 8
        %s413 = scalar_lea.vmem %s8, %s412
        %s414 = smul.u32 2, %s30
        %v415 = vld [vmem:[%s349] sm:$0xff]
        %v416 = vld [vmem:[%s349 + $0x8] sm:$0xff]
        %v417 = vld [vmem:[%s349 + $0x10] sm:$0xff]
        %v418 = vld [vmem:[%s349 + $0x18] sm:$0xff]
        %421 = vrot.lane.b32.xlu0 %v415, 124
        %v422 = vpop.permute.xlu0 %421
        %423 = vrot.lane.b32.xlu0 %v417, 124
        %v424 = vpop.permute.xlu0 %423
        %v427 = vmax.f32 %v415, %v422
        %v428 = vmax.f32 %v417, %v424
        %431 = vrot.lane.b32.xlu0 %v416, 124
        %v432 = vpop.permute.xlu0 %431
        %433 = vrot.lane.b32.xlu0 %v418, 124
        %v434 = vpop.permute.xlu0 %433
        %v437 = vmax.f32 %v416, %v432
        %v438 = vmax.f32 %v418, %v434
        %v439 = vmax.f32 %v427, %v437
        %v440 = vmax.f32 %v428, %v438
        %v441 = vld [vmem:[%s2] sm:$0xf]
        %vm442 = vcmask 31744
        %v444 = vsel %vm442, %v439, 0
        %v447 = vsel %vm442, %v440, 0
        %vm449 = vcmask 1043456
        %v451 = vsel %vm449, %v441, 0
        %453 = vmatprep.subr.mxu0 0.0
        %454 = vmatpush1.msra.mxu0 %v451
        %455 = vmatprep.subr.mxu0 0.0
        %456 = vmatpush1.msra.mxu0 0.0
        %457 = vmatprep.subr.mxu0 0.0
        %458 = vmatpush1.msra.mxu0 0.0
        %459 = vmatprep.subr.mxu0 0.0
        %460 = vmatpush1.msra.mxu0 0.0
        %461 = vmatprep.subr.mxu0 0.0
        %462 = vmatpush1.msra.mxu0 0.0
        %463 = vmatprep.subr.mxu0 0.0
        %464 = vmatpush1.msra.mxu0 0.0
        %465 = vmatprep.subr.mxu0 0.0
        %466 = vmatpush1.msra.mxu0 0.0
        %467 = vmatprep.subr.mxu0 0.0
        %468 = vmatpush1.msra.mxu0 0.0
        %469 = vmatprep.subr.mxu0 0.0
        %470 = vmatpush1.msra.mxu0 0.0
        %471 = vmatprep.subr.mxu0 0.0
        %472 = vmatpush1.msra.mxu0 0.0
        %473 = vmatprep.subr.mxu0 0.0
        %474 = vmatpush1.msra.mxu0 0.0
        %475 = vmatprep.subr.mxu0 0.0
        %476 = vmatpush1.msra.mxu0 0.0
        %477 = vmatprep.subr.mxu0 0.0
        %478 = vmatpush1.msra.mxu0 0.0
        %479 = vmatprep.subr.mxu0 0.0
        %480 = vmatpush1.msra.mxu0 0.0
        %481 = vmatprep.subr.mxu0 0.0
        %482 = vmatpush1.msra.mxu0 0.0
        %483 = vmatprep.subr.mxu0 0.0
        %484 = vmatpush1.msra.mxu0 0.0
        %485 = vmatprep.subr.mxu0 0.0
        %486 = vmatpush1.msra.mxu0 0.0
        %487 = vmatprep.subr.mxu0 0.0
        %488 = vmatpush1.msra.mxu0 0.0
        %489 = vmatprep.subr.mxu0 0.0
        %490 = vmatpush1.msra.mxu0 0.0
        %491 = vmatprep.subr.mxu0 0.0
        %492 = vmatpush1.msra.mxu0 0.0
        %493 = vmatprep.subr.mxu0 0.0
        %494 = vmatpush1.msra.mxu0 0.0
        %495 = vmatprep.subr.mxu0 0.0
        %496 = vmatpush1.msra.mxu0 0.0
        %497 = vmatprep.subr.mxu0 0.0
        %498 = vmatpush1.msra.mxu0 0.0
        %499 = vmatprep.subr.mxu0 0.0
        %500 = vmatpush1.msra.mxu0 0.0
        %501 = vmatprep.subr.mxu0 0.0
        %502 = vmatpush1.msra.mxu0 0.0
        %503 = vmatprep.subr.mxu0 0.0
        %504 = vmatpush1.msra.mxu0 0.0
        %505 = vmatprep.subr.mxu0 0.0
        %506 = vmatpush1.msra.mxu0 0.0
        %507 = vmatprep.subr.mxu0 0.0
        %508 = vmatpush1.msra.mxu0 0.0
        %509 = vmatprep.subr.mxu0 0.0
        %510 = vmatpush1.msra.mxu0 0.0
        %511 = vmatprep.subr.mxu0 0.0
        %512 = vmatpush1.msra.mxu0 0.0
        %513 = vmatprep.subr.mxu0 0.0
        %514 = vmatpush1.msra.mxu0 0.0
        %515 = vmatprep.subr.mxu0 0.0
        %516 = vmatpush1.msra.mxu0 0.0
        %517 = vmatprep.mubr.f32.mxu0 0.0
        %518 = vmatmul.mubr.f32.gmra.mrb[0].mxu0 %v444
        %v519 = vpop.f32.mrb[0].mxu0
        %v520 = vadd.f32 0.0, %v519
        %v521 = vpop.f32.mrb[0].mxu0
        %522 = vmatprep.mubr.f32.mxu0 0.0
        %523 = vmatmul.mubr.f32.gmra.mrb[0].mxu0 %v447
        %v524 = vpop.f32.mrb[0].mxu0
        %v525 = vadd.f32 0.0, %v524
        %v526 = vpop.f32.mrb[0].mxu0
        %527 = vdwg.mxu0
        %v528 = vld [vmem:[%s3] sm:$0x1]
        %v529 = vlaneseq
        %v530 = vshrl.u32 %v529, 7
        %v531 = vsub.s32 0, %v530
        %v532 = vrot.slane %v528, %v531
        %v533 = vmul.f32 %v520, %v532
        %v534 = vmul.f32 %v525, %v532
        %v535 = vld [vmem:[%s3 + $0x1] sm:$0x1]
        %v536 = vlaneseq
        %v537 = vshrl.u32 %v536, 7
        %v538 = vsub.s32 0, %v537
        %v539 = vrot.slane %v535, %v538
        %v540 = vadd.f32 %v533, %v539
        %v541 = vadd.f32 %v534, %v539
        %v542 = vxor.u32 %v540, 2147483648
        %v543 = vxor.u32 %v541, 2147483648
        %v544 = vmul.f32 %v542, 1.442695
        %v545 = vpow.pop %v544
        %v546 = vmul.f32 %v543, 1.442695
        %v547 = vpow.pop %v546
        %v548 = vadd.f32 %v545, 1.0
        %v549 = vadd.f32 %v547, 1.0
        %v550 = vrcp.pop %v548
        %v551 = vmul.f32 1.0, %v550
        %v552 = vrcp.pop %v549
        %v553 = vmul.f32 1.0, %v552
        %v554 = vmul.f32 %v540, %v551
        %v555 = vmul.f32 %v541, %v553
        %v556 = vld [vmem:[%s4] sm:$0xf]
        %v557 = vsel %vm442, %v415, 0
        %v559 = vsel %vm442, %v417, 0
        %v562 = vsel %vm449, %v556, 0
        %564 = vmatprep.subr.mxu0 0.0
        %565 = vmatpush1.msra.mxu0 %v562
        %566 = vmatprep.subr.mxu0 0.0
        %567 = vmatpush1.msra.mxu0 0.0
        %568 = vmatprep.subr.mxu0 0.0
        %569 = vmatpush1.msra.mxu0 0.0
        %570 = vmatprep.subr.mxu0 0.0
        %571 = vmatpush1.msra.mxu0 0.0
        %572 = vmatprep.subr.mxu0 0.0
        %573 = vmatpush1.msra.mxu0 0.0
        %574 = vmatprep.subr.mxu0 0.0
        %575 = vmatpush1.msra.mxu0 0.0
        %576 = vmatprep.subr.mxu0 0.0
        %577 = vmatpush1.msra.mxu0 0.0
        %578 = vmatprep.subr.mxu0 0.0
        %579 = vmatpush1.msra.mxu0 0.0
        %580 = vmatprep.subr.mxu0 0.0
        %581 = vmatpush1.msra.mxu0 0.0
        %582 = vmatprep.subr.mxu0 0.0
        %583 = vmatpush1.msra.mxu0 0.0
        %584 = vmatprep.subr.mxu0 0.0
        %585 = vmatpush1.msra.mxu0 0.0
        %586 = vmatprep.subr.mxu0 0.0
        %587 = vmatpush1.msra.mxu0 0.0
        %588 = vmatprep.subr.mxu0 0.0
        %589 = vmatpush1.msra.mxu0 0.0
        %590 = vmatprep.subr.mxu0 0.0
        %591 = vmatpush1.msra.mxu0 0.0
        %592 = vmatprep.subr.mxu0 0.0
        %593 = vmatpush1.msra.mxu0 0.0
        %594 = vmatprep.subr.mxu0 0.0
        %595 = vmatpush1.msra.mxu0 0.0
        %596 = vmatprep.subr.mxu0 0.0
        %597 = vmatpush1.msra.mxu0 0.0
        %598 = vmatprep.subr.mxu0 0.0
        %599 = vmatpush1.msra.mxu0 0.0
        %600 = vmatprep.subr.mxu0 0.0
        %601 = vmatpush1.msra.mxu0 0.0
        %602 = vmatprep.subr.mxu0 0.0
        %603 = vmatpush1.msra.mxu0 0.0
        %604 = vmatprep.subr.mxu0 0.0
        %605 = vmatpush1.msra.mxu0 0.0
        %606 = vmatprep.subr.mxu0 0.0
        %607 = vmatpush1.msra.mxu0 0.0
        %608 = vmatprep.subr.mxu0 0.0
        %609 = vmatpush1.msra.mxu0 0.0
        %610 = vmatprep.subr.mxu0 0.0
        %611 = vmatpush1.msra.mxu0 0.0
        %612 = vmatprep.subr.mxu0 0.0
        %613 = vmatpush1.msra.mxu0 0.0
        %614 = vmatprep.subr.mxu0 0.0
        %615 = vmatpush1.msra.mxu0 0.0
        %616 = vmatprep.subr.mxu0 0.0
        %617 = vmatpush1.msra.mxu0 0.0
        %618 = vmatprep.subr.mxu0 0.0
        %619 = vmatpush1.msra.mxu0 0.0
        %620 = vmatprep.subr.mxu0 0.0
        %621 = vmatpush1.msra.mxu0 0.0
        %622 = vmatprep.subr.mxu0 0.0
        %623 = vmatpush1.msra.mxu0 0.0
        %624 = vmatprep.subr.mxu0 0.0
        %625 = vmatpush1.msra.mxu0 0.0
        %626 = vmatprep.subr.mxu0 0.0
        %627 = vmatpush1.msra.mxu0 0.0
        %628 = vmatprep.mubr.f32.mxu0 0.0
        %629 = vmatmul.mubr.f32.gmra.mrb[0].mxu0 %v557
        %v630 = vpop.f32.mrb[0].mxu0
        %v631 = vadd.f32 0.0, %v630
        %v632 = vpop.f32.mrb[0].mxu0
        %633 = vmatprep.mubr.f32.mxu0 0.0
        %634 = vmatmul.mubr.f32.gmra.mrb[0].mxu0 %v559
        %v635 = vpop.f32.mrb[0].mxu0
        %v636 = vadd.f32 0.0, %v635
        %v637 = vpop.f32.mrb[0].mxu0
        %638 = vdwg.mxu0
        %v639 = vld [vmem:[%s5] sm:$0x1]
        %v640 = vlaneseq
        %v641 = vshrl.u32 %v640, 7
        %v642 = vsub.s32 0, %v641
        %v643 = vrot.slane %v639, %v642
        %v644 = vmul.f32 %v631, %v643
        %v645 = vmul.f32 %v636, %v643
        %v646 = vld [vmem:[%s5 + $0x1] sm:$0x1]
        %v647 = vlaneseq
        %v648 = vshrl.u32 %v647, 7
        %v649 = vsub.s32 0, %v648
        %v650 = vrot.slane %v646, %v649
        %v651 = vadd.f32 %v644, %v650
        %v652 = vadd.f32 %v645, %v650
        %v653 = vxor.u32 %v651, 2147483648
        %v654 = vxor.u32 %v652, 2147483648
        %v655 = vmul.f32 %v653, 1.442695
        %v656 = vpow.pop %v655
        %v657 = vmul.f32 %v654, 1.442695
        %v658 = vpow.pop %v657
        %v659 = vadd.f32 %v656, 1.0
        %v660 = vadd.f32 %v658, 1.0
        %v661 = vrcp.pop %v659
        %v662 = vmul.f32 1.0, %v661
        %v663 = vrcp.pop %v660
        %v664 = vmul.f32 1.0, %v663
        %v665 = vmul.f32 %v651, %v662
        %v666 = vmul.f32 %v652, %v664
        %v667 = vsel %vm442, %v422, 0
        %v669 = vsel %vm442, %v424, 0
        %671 = vmatprep.subr.mxu0 0.0
        %672 = vmatpush1.msra.mxu0 %v562
        %673 = vmatprep.subr.mxu0 0.0
        %674 = vmatpush1.msra.mxu0 0.0
        %675 = vmatprep.subr.mxu0 0.0
        %676 = vmatpush1.msra.mxu0 0.0
        %677 = vmatprep.subr.mxu0 0.0
        %678 = vmatpush1.msra.mxu0 0.0
        %679 = vmatprep.subr.mxu0 0.0
        %680 = vmatpush1.msra.mxu0 0.0
        %681 = vmatprep.subr.mxu0 0.0
        %682 = vmatpush1.msra.mxu0 0.0
        %683 = vmatprep.subr.mxu0 0.0
        %684 = vmatpush1.msra.mxu0 0.0
        %685 = vmatprep.subr.mxu0 0.0
        %686 = vmatpush1.msra.mxu0 0.0
        %687 = vmatprep.subr.mxu0 0.0
        %688 = vmatpush1.msra.mxu0 0.0
        %689 = vmatprep.subr.mxu0 0.0
        %690 = vmatpush1.msra.mxu0 0.0
        %691 = vmatprep.subr.mxu0 0.0
        %692 = vmatpush1.msra.mxu0 0.0
        %693 = vmatprep.subr.mxu0 0.0
        %694 = vmatpush1.msra.mxu0 0.0
        %695 = vmatprep.subr.mxu0 0.0
        %696 = vmatpush1.msra.mxu0 0.0
        %697 = vmatprep.subr.mxu0 0.0
        %698 = vmatpush1.msra.mxu0 0.0
        %699 = vmatprep.subr.mxu0 0.0
        %700 = vmatpush1.msra.mxu0 0.0
        %701 = vmatprep.subr.mxu0 0.0
        %702 = vmatpush1.msra.mxu0 0.0
        %703 = vmatprep.subr.mxu0 0.0
        %704 = vmatpush1.msra.mxu0 0.0
        %705 = vmatprep.subr.mxu0 0.0
        %706 = vmatpush1.msra.mxu0 0.0
        %707 = vmatprep.subr.mxu0 0.0
        %708 = vmatpush1.msra.mxu0 0.0
        %709 = vmatprep.subr.mxu0 0.0
        %710 = vmatpush1.msra.mxu0 0.0
        %711 = vmatprep.subr.mxu0 0.0
        %712 = vmatpush1.msra.mxu0 0.0
        %713 = vmatprep.subr.mxu0 0.0
        %714 = vmatpush1.msra.mxu0 0.0
        %715 = vmatprep.subr.mxu0 0.0
        %716 = vmatpush1.msra.mxu0 0.0
        %717 = vmatprep.subr.mxu0 0.0
        %718 = vmatpush1.msra.mxu0 0.0
        %719 = vmatprep.subr.mxu0 0.0
        %720 = vmatpush1.msra.mxu0 0.0
        %721 = vmatprep.subr.mxu0 0.0
        %722 = vmatpush1.msra.mxu0 0.0
        %723 = vmatprep.subr.mxu0 0.0
        %724 = vmatpush1.msra.mxu0 0.0
        %725 = vmatprep.subr.mxu0 0.0
        %726 = vmatpush1.msra.mxu0 0.0
        %727 = vmatprep.subr.mxu0 0.0
        %728 = vmatpush1.msra.mxu0 0.0
        %729 = vmatprep.subr.mxu0 0.0
        %730 = vmatpush1.msra.mxu0 0.0
        %731 = vmatprep.subr.mxu0 0.0
        %732 = vmatpush1.msra.mxu0 0.0
        %733 = vmatprep.subr.mxu0 0.0
        %734 = vmatpush1.msra.mxu0 0.0
        %735 = vmatprep.mubr.f32.mxu0 0.0
        %736 = vmatmul.mubr.f32.gmra.mrb[0].mxu0 %v667
        %v737 = vpop.f32.mrb[0].mxu0
        %v738 = vadd.f32 0.0, %v737
        %v739 = vpop.f32.mrb[0].mxu0
        %740 = vmatprep.mubr.f32.mxu0 0.0
        %741 = vmatmul.mubr.f32.gmra.mrb[0].mxu0 %v669
        %v742 = vpop.f32.mrb[0].mxu0
        %v743 = vadd.f32 0.0, %v742
        %v744 = vpop.f32.mrb[0].mxu0
        %745 = vdwg.mxu0
        %v746 = vmul.f32 %v738, %v643
        %v747 = vmul.f32 %v743, %v643
        %v748 = vadd.f32 %v746, %v650
        %v749 = vadd.f32 %v747, %v650
        %v750 = vxor.u32 %v748, 2147483648
        %v751 = vxor.u32 %v749, 2147483648
        %v752 = vmul.f32 %v750, 1.442695
        %v753 = vpow.pop %v752
        %v754 = vmul.f32 %v751, 1.442695
        %v755 = vpow.pop %v754
        %v756 = vadd.f32 %v753, 1.0
        %v757 = vadd.f32 %v755, 1.0
        %v758 = vrcp.pop %v756
        %v759 = vmul.f32 1.0, %v758
        %v760 = vrcp.pop %v757
        %v761 = vmul.f32 1.0, %v760
        %v762 = vmul.f32 %v748, %v759
        %v763 = vmul.f32 %v749, %v761
        %v764 = vsel %vm442, %v416, 0
        %v766 = vsel %vm442, %v418, 0
        %768 = vmatprep.subr.mxu0 0.0
        %769 = vmatpush1.msra.mxu0 %v562
        %770 = vmatprep.subr.mxu0 0.0
        %771 = vmatpush1.msra.mxu0 0.0
        %772 = vmatprep.subr.mxu0 0.0
        %773 = vmatpush1.msra.mxu0 0.0
        %774 = vmatprep.subr.mxu0 0.0
        %775 = vmatpush1.msra.mxu0 0.0
        %776 = vmatprep.subr.mxu0 0.0
        %777 = vmatpush1.msra.mxu0 0.0
        %778 = vmatprep.subr.mxu0 0.0
        %779 = vmatpush1.msra.mxu0 0.0
        %780 = vmatprep.subr.mxu0 0.0
        %781 = vmatpush1.msra.mxu0 0.0
        %782 = vmatprep.subr.mxu0 0.0
        %783 = vmatpush1.msra.mxu0 0.0
        %784 = vmatprep.subr.mxu0 0.0
        %785 = vmatpush1.msra.mxu0 0.0
        %786 = vmatprep.subr.mxu0 0.0
        %787 = vmatpush1.msra.mxu0 0.0
        %788 = vmatprep.subr.mxu0 0.0
        %789 = vmatpush1.msra.mxu0 0.0
        %790 = vmatprep.subr.mxu0 0.0
        %791 = vmatpush1.msra.mxu0 0.0
        %792 = vmatprep.subr.mxu0 0.0
        %793 = vmatpush1.msra.mxu0 0.0
        %794 = vmatprep.subr.mxu0 0.0
        %795 = vmatpush1.msra.mxu0 0.0
        %796 = vmatprep.subr.mxu0 0.0
        %797 = vmatpush1.msra.mxu0 0.0
        %798 = vmatprep.subr.mxu0 0.0
        %799 = vmatpush1.msra.mxu0 0.0
        %800 = vmatprep.subr.mxu0 0.0
        %801 = vmatpush1.msra.mxu0 0.0
        %802 = vmatprep.subr.mxu0 0.0
        %803 = vmatpush1.msra.mxu0 0.0
        %804 = vmatprep.subr.mxu0 0.0
        %805 = vmatpush1.msra.mxu0 0.0
        %806 = vmatprep.subr.mxu0 0.0
        %807 = vmatpush1.msra.mxu0 0.0
        %808 = vmatprep.subr.mxu0 0.0
        %809 = vmatpush1.msra.mxu0 0.0
        %810 = vmatprep.subr.mxu0 0.0
        %811 = vmatpush1.msra.mxu0 0.0
        %812 = vmatprep.subr.mxu0 0.0
        %813 = vmatpush1.msra.mxu0 0.0
        %814 = vmatprep.subr.mxu0 0.0
        %815 = vmatpush1.msra.mxu0 0.0
        %816 = vmatprep.subr.mxu0 0.0
        %817 = vmatpush1.msra.mxu0 0.0
        %818 = vmatprep.subr.mxu0 0.0
        %819 = vmatpush1.msra.mxu0 0.0
        %820 = vmatprep.subr.mxu0 0.0
        %821 = vmatpush1.msra.mxu0 0.0
        %822 = vmatprep.subr.mxu0 0.0
        %823 = vmatpush1.msra.mxu0 0.0
        %824 = vmatprep.subr.mxu0 0.0
        %825 = vmatpush1.msra.mxu0 0.0
        %826 = vmatprep.subr.mxu0 0.0
        %827 = vmatpush1.msra.mxu0 0.0
        %828 = vmatprep.subr.mxu0 0.0
        %829 = vmatpush1.msra.mxu0 0.0
        %830 = vmatprep.subr.mxu0 0.0
        %831 = vmatpush1.msra.mxu0 0.0
        %832 = vmatprep.mubr.f32.mxu0 0.0
        %833 = vmatmul.mubr.f32.gmra.mrb[0].mxu0 %v764
        %v834 = vpop.f32.mrb[0].mxu0
        %v835 = vadd.f32 0.0, %v834
        %v836 = vpop.f32.mrb[0].mxu0
        %837 = vmatprep.mubr.f32.mxu0 0.0
        %838 = vmatmul.mubr.f32.gmra.mrb[0].mxu0 %v766
        %v839 = vpop.f32.mrb[0].mxu0
        %v840 = vadd.f32 0.0, %v839
        %v841 = vpop.f32.mrb[0].mxu0
        %842 = vdwg.mxu0
        %v843 = vmul.f32 %v835, %v643
        %v844 = vmul.f32 %v840, %v643
        %v845 = vadd.f32 %v843, %v650
        %v846 = vadd.f32 %v844, %v650
        %v847 = vxor.u32 %v845, 2147483648
        %v848 = vxor.u32 %v846, 2147483648
        %v849 = vmul.f32 %v847, 1.442695
        %v850 = vpow.pop %v849
        %v851 = vmul.f32 %v848, 1.442695
        %v852 = vpow.pop %v851
        %v853 = vadd.f32 %v850, 1.0
        %v854 = vadd.f32 %v852, 1.0
        %v855 = vrcp.pop %v853
        %v856 = vmul.f32 1.0, %v855
        %v857 = vrcp.pop %v854
        %v858 = vmul.f32 1.0, %v857
        %v859 = vmul.f32 %v845, %v856
        %v860 = vmul.f32 %v846, %v858
        %v861 = vsel %vm442, %v432, 0
        %v863 = vsel %vm442, %v434, 0
        %865 = vmatprep.subr.mxu0 0.0
        %866 = vmatpush1.msra.mxu0 %v562
        %867 = vmatprep.subr.mxu0 0.0
        %868 = vmatpush1.msra.mxu0 0.0
        %869 = vmatprep.subr.mxu0 0.0
        %870 = vmatpush1.msra.mxu0 0.0
        %871 = vmatprep.subr.mxu0 0.0
        %872 = vmatpush1.msra.mxu0 0.0
        %873 = vmatprep.subr.mxu0 0.0
        %874 = vmatpush1.msra.mxu0 0.0
        %875 = vmatprep.subr.mxu0 0.0
        %876 = vmatpush1.msra.mxu0 0.0
        %877 = vmatprep.subr.mxu0 0.0
        %878 = vmatpush1.msra.mxu0 0.0
        %879 = vmatprep.subr.mxu0 0.0
        %880 = vmatpush1.msra.mxu0 0.0
        %881 = vmatprep.subr.mxu0 0.0
        %882 = vmatpush1.msra.mxu0 0.0
        %883 = vmatprep.subr.mxu0 0.0
        %884 = vmatpush1.msra.mxu0 0.0
        %885 = vmatprep.subr.mxu0 0.0
        %886 = vmatpush1.msra.mxu0 0.0
        %887 = vmatprep.subr.mxu0 0.0
        %888 = vmatpush1.msra.mxu0 0.0
        %889 = vmatprep.subr.mxu0 0.0
        %890 = vmatpush1.msra.mxu0 0.0
        %891 = vmatprep.subr.mxu0 0.0
        %892 = vmatpush1.msra.mxu0 0.0
        %893 = vmatprep.subr.mxu0 0.0
        %894 = vmatpush1.msra.mxu0 0.0
        %895 = vmatprep.subr.mxu0 0.0
        %896 = vmatpush1.msra.mxu0 0.0
        %897 = vmatprep.subr.mxu0 0.0
        %898 = vmatpush1.msra.mxu0 0.0
        %899 = vmatprep.subr.mxu0 0.0
        %900 = vmatpush1.msra.mxu0 0.0
        %901 = vmatprep.subr.mxu0 0.0
        %902 = vmatpush1.msra.mxu0 0.0
        %903 = vmatprep.subr.mxu0 0.0
        %904 = vmatpush1.msra.mxu0 0.0
        %905 = vmatprep.subr.mxu0 0.0
        %906 = vmatpush1.msra.mxu0 0.0
        %907 = vmatprep.subr.mxu0 0.0
        %908 = vmatpush1.msra.mxu0 0.0
        %909 = vmatprep.subr.mxu0 0.0
        %910 = vmatpush1.msra.mxu0 0.0
        %911 = vmatprep.subr.mxu0 0.0
        %912 = vmatpush1.msra.mxu0 0.0
        %913 = vmatprep.subr.mxu0 0.0
        %914 = vmatpush1.msra.mxu0 0.0
        %915 = vmatprep.subr.mxu0 0.0
        %916 = vmatpush1.msra.mxu0 0.0
        %917 = vmatprep.subr.mxu0 0.0
        %918 = vmatpush1.msra.mxu0 0.0
        %919 = vmatprep.subr.mxu0 0.0
        %920 = vmatpush1.msra.mxu0 0.0
        %921 = vmatprep.subr.mxu0 0.0
        %922 = vmatpush1.msra.mxu0 0.0
        %923 = vmatprep.subr.mxu0 0.0
        %924 = vmatpush1.msra.mxu0 0.0
        %925 = vmatprep.subr.mxu0 0.0
        %926 = vmatpush1.msra.mxu0 0.0
        %927 = vmatprep.subr.mxu0 0.0
        %928 = vmatpush1.msra.mxu0 0.0
        %929 = vmatprep.mubr.f32.mxu0 0.0
        %930 = vmatmul.mubr.f32.gmra.mrb[0].mxu0 %v861
        %v931 = vpop.f32.mrb[0].mxu0
        %v932 = vadd.f32 0.0, %v931
        %v933 = vpop.f32.mrb[0].mxu0
        %934 = vmatprep.mubr.f32.mxu0 0.0
        %935 = vmatmul.mubr.f32.gmra.mrb[0].mxu0 %v863
        %v936 = vpop.f32.mrb[0].mxu0
        %v937 = vadd.f32 0.0, %v936
        %v938 = vpop.f32.mrb[0].mxu0
        %939 = vdwg.mxu0
        %v940 = vmul.f32 %v932, %v643
        %v941 = vmul.f32 %v937, %v643
        %v942 = vadd.f32 %v940, %v650
        %v943 = vadd.f32 %v941, %v650
        %v944 = vxor.u32 %v942, 2147483648
        %v945 = vxor.u32 %v943, 2147483648
        %v946 = vmul.f32 %v944, 1.442695
        %v947 = vpow.pop %v946
        %v948 = vmul.f32 %v945, 1.442695
        %v949 = vpow.pop %v948
        %v950 = vadd.f32 %v947, 1.0
        %v951 = vadd.f32 %v949, 1.0
        %v952 = vrcp.pop %v950
        %v953 = vmul.f32 1.0, %v952
        %v954 = vrcp.pop %v951
        %v955 = vmul.f32 1.0, %v954
        %v956 = vmul.f32 %v942, %v953
        %v957 = vmul.f32 %v943, %v955
        %s958 = scalar_lea.vmem [#allocation2], 144
        %vm959 = vcmask 15360
        %960 = vst.msk [vmem:[%s958] sm:$0xff] %vm959, %v665
        %961 = vst.msk [vmem:[%s958 + $0x10] sm:$0xff] %vm959, %v666
        %v964 = vrot.slane %v762, 7
        %v965 = vrot.slane %v763, 7
        %vm968 = vcmask 1040384
        %v969 = vsel %vm968, 0.0, %v964
        %v970 = vsel %vm968, 0.0, %v965
        %s971 = scalar_lea.vmem [#allocation2], 96
        %972 = vst.msk [vmem:[%s971] sm:$0xff] %vm959, %v969
        %vm973 = vcmask 8192
        %974 = vst.msk [vmem:[%s971 + $0x8] sm:$0x1] %vm973, %v964
        %975 = vst.msk [vmem:[%s971 + $0x10] sm:$0xff] %vm959, %v970
        %976 = vst.msk [vmem:[%s971 + $0x18] sm:$0x1] %vm973, %v965
        %s977 = scalar_lea.vmem [#allocation2], 64
        %978 = vst.msk [vmem:[%s977] sm:$0xff] %vm959, %v859
        %979 = vst.msk [vmem:[%s977 + $0x10] sm:$0xff] %vm959, %v860
        %v982 = vrot.slane %v956, 7
        %v983 = vrot.slane %v957, 7
        %v986 = vsel %vm968, 0.0, %v982
        %v987 = vsel %vm968, 0.0, %v983
        %s988 = scalar_lea.vmem [#allocation2], 16
        %989 = vst.msk [vmem:[%s988] sm:$0xff] %vm959, %v986
        %990 = vst.msk [vmem:[%s988 + $0x8] sm:$0x1] %vm973, %v982
        %991 = vst.msk [vmem:[%s988 + $0x10] sm:$0xff] %vm959, %v987
        %992 = vst.msk [vmem:[%s988 + $0x18] sm:$0x1] %vm973, %v983
        %p993 = scmp.gt.s32.totalorder %s30, 0
        %s994 = scalar_select %p993, 1, 0
        %s995 = scvt.s32.f32 %s994
        %s996 = scalar_lea.vmem %s358, 8 [#allocation5]
        %v997 = vld [vmem:[%s996] sm:$0xff]
        %v998 = vld [vmem:[%s4] sm:$0xf]
        %v1000 = vsel %vm442, %v997, 0
        %v1003 = vsel %vm449, %v998, 0
        %1005 = vmatprep.subr.mxu0 0.0
        %1006 = vmatpush1.msra.mxu0 %v1003
        %1007 = vmatprep.subr.mxu0 0.0
        %1008 = vmatpush1.msra.mxu0 0.0
        %1009 = vmatprep.subr.mxu0 0.0
        %1010 = vmatpush1.msra.mxu0 0.0
        %1011 = vmatprep.subr.mxu0 0.0
        %1012 = vmatpush1.msra.mxu0 0.0
        %1013 = vmatprep.subr.mxu0 0.0
        %1014 = vmatpush1.msra.mxu0 0.0
        %1015 = vmatprep.subr.mxu0 0.0
        %1016 = vmatpush1.msra.mxu0 0.0
        %1017 = vmatprep.subr.mxu0 0.0
        %1018 = vmatpush1.msra.mxu0 0.0
        %1019 = vmatprep.subr.mxu0 0.0
        %1020 = vmatpush1.msra.mxu0 0.0
        %1021 = vmatprep.subr.mxu0 0.0
        %1022 = vmatpush1.msra.mxu0 0.0
        %1023 = vmatprep.subr.mxu0 0.0
        %1024 = vmatpush1.msra.mxu0 0.0
        %1025 = vmatprep.subr.mxu0 0.0
        %1026 = vmatpush1.msra.mxu0 0.0
        %1027 = vmatprep.subr.mxu0 0.0
        %1028 = vmatpush1.msra.mxu0 0.0
        %1029 = vmatprep.subr.mxu0 0.0
        %1030 = vmatpush1.msra.mxu0 0.0
        %1031 = vmatprep.subr.mxu0 0.0
        %1032 = vmatpush1.msra.mxu0 0.0
        %1033 = vmatprep.subr.mxu0 0.0
        %1034 = vmatpush1.msra.mxu0 0.0
        %1035 = vmatprep.subr.mxu0 0.0
        %1036 = vmatpush1.msra.mxu0 0.0
        %1037 = vmatprep.subr.mxu0 0.0
        %1038 = vmatpush1.msra.mxu0 0.0
        %1039 = vmatprep.subr.mxu0 0.0
        %1040 = vmatpush1.msra.mxu0 0.0
        %1041 = vmatprep.subr.mxu0 0.0
        %1042 = vmatpush1.msra.mxu0 0.0
        %1043 = vmatprep.subr.mxu0 0.0
        %1044 = vmatpush1.msra.mxu0 0.0
        %1045 = vmatprep.subr.mxu0 0.0
        %1046 = vmatpush1.msra.mxu0 0.0
        %1047 = vmatprep.subr.mxu0 0.0
        %1048 = vmatpush1.msra.mxu0 0.0
        %1049 = vmatprep.subr.mxu0 0.0
        %1050 = vmatpush1.msra.mxu0 0.0
        %1051 = vmatprep.subr.mxu0 0.0
        %1052 = vmatpush1.msra.mxu0 0.0
        %1053 = vmatprep.subr.mxu0 0.0
        %1054 = vmatpush1.msra.mxu0 0.0
        %1055 = vmatprep.subr.mxu0 0.0
        %1056 = vmatpush1.msra.mxu0 0.0
        %1057 = vmatprep.subr.mxu0 0.0
        %1058 = vmatpush1.msra.mxu0 0.0
        %1059 = vmatprep.subr.mxu0 0.0
        %1060 = vmatpush1.msra.mxu0 0.0
        %1061 = vmatprep.subr.mxu0 0.0
        %1062 = vmatpush1.msra.mxu0 0.0
        %1063 = vmatprep.subr.mxu0 0.0
        %1064 = vmatpush1.msra.mxu0 0.0
        %1065 = vmatprep.subr.mxu0 0.0
        %1066 = vmatpush1.msra.mxu0 0.0
        %1067 = vmatprep.subr.mxu0 0.0
        %1068 = vmatpush1.msra.mxu0 0.0
        %1069 = vmatprep.mubr.f32.mxu0 0.0
        %1070 = vmatmul.mubr.f32.gmra.mrb[0].mxu0 %v1000
        %v1071 = vpop.f32.mrb[0].mxu0
        %v1072 = vadd.f32 0.0, %v1071
        %v1073 = vpop.f32.mrb[0].mxu0
        %1074 = vdwg.mxu0
        %v1075 = vld [vmem:[%s5] sm:$0x1]
        %v1076 = vlaneseq
        %v1077 = vshrl.u32 %v1076, 7
        %v1078 = vsub.s32 0, %v1077
        %v1079 = vrot.slane %v1075, %v1078
        %v1080 = vmul.f32 %v1072, %v1079
        %v1081 = vld [vmem:[%s5 + $0x1] sm:$0x1]
        %v1082 = vlaneseq
        %v1083 = vshrl.u32 %v1082, 7
        %v1084 = vsub.s32 0, %v1083
        %v1085 = vrot.slane %v1081, %v1084
        %v1086 = vadd.f32 %v1080, %v1085
        %v1087 = vxor.u32 %v1086, 2147483648
        %v1088 = vmul.f32 %v1087, 1.442695
        %v1089 = vpow.pop %v1088
        %v1090 = vadd.f32 %v1089, 1.0
        %v1091 = vrcp.pop %v1090
        %v1092 = vmul.f32 1.0, %v1091
        %v1093 = vmul.f32 %v1086, %v1092
        %v1094 = vstv %s995
        %v1095 = vmul.f32 %v1093, %v1094
        %1096 = vrot.lane.b32.xlu0 %v997, 124
        %v1097 = vpop.permute.xlu0 %1096
        %v1098 = vsel %vm442, %v1097, 0
        %1100 = vmatprep.subr.mxu0 0.0
        %1101 = vmatpush1.msra.mxu0 %v1003
        %1102 = vmatprep.subr.mxu0 0.0
        %1103 = vmatpush1.msra.mxu0 0.0
        %1104 = vmatprep.subr.mxu0 0.0
        %1105 = vmatpush1.msra.mxu0 0.0
        %1106 = vmatprep.subr.mxu0 0.0
        %1107 = vmatpush1.msra.mxu0 0.0
        %1108 = vmatprep.subr.mxu0 0.0
        %1109 = vmatpush1.msra.mxu0 0.0
        %1110 = vmatprep.subr.mxu0 0.0
        %1111 = vmatpush1.msra.mxu0 0.0
        %1112 = vmatprep.subr.mxu0 0.0
        %1113 = vmatpush1.msra.mxu0 0.0
        %1114 = vmatprep.subr.mxu0 0.0
        %1115 = vmatpush1.msra.mxu0 0.0
        %1116 = vmatprep.subr.mxu0 0.0
        %1117 = vmatpush1.msra.mxu0 0.0
        %1118 = vmatprep.subr.mxu0 0.0
        %1119 = vmatpush1.msra.mxu0 0.0
        %1120 = vmatprep.subr.mxu0 0.0
        %1121 = vmatpush1.msra.mxu0 0.0
        %1122 = vmatprep.subr.mxu0 0.0
        %1123 = vmatpush1.msra.mxu0 0.0
        %1124 = vmatprep.subr.mxu0 0.0
        %1125 = vmatpush1.msra.mxu0 0.0
        %1126 = vmatprep.subr.mxu0 0.0
        %1127 = vmatpush1.msra.mxu0 0.0
        %1128 = vmatprep.subr.mxu0 0.0
        %1129 = vmatpush1.msra.mxu0 0.0
        %1130 = vmatprep.subr.mxu0 0.0
        %1131 = vmatpush1.msra.mxu0 0.0
        %1132 = vmatprep.subr.mxu0 0.0
        %1133 = vmatpush1.msra.mxu0 0.0
        %1134 = vmatprep.subr.mxu0 0.0
        %1135 = vmatpush1.msra.mxu0 0.0
        %1136 = vmatprep.subr.mxu0 0.0
        %1137 = vmatpush1.msra.mxu0 0.0
        %1138 = vmatprep.subr.mxu0 0.0
        %1139 = vmatpush1.msra.mxu0 0.0
        %1140 = vmatprep.subr.mxu0 0.0
        %1141 = vmatpush1.msra.mxu0 0.0
        %1142 = vmatprep.subr.mxu0 0.0
        %1143 = vmatpush1.msra.mxu0 0.0
        %1144 = vmatprep.subr.mxu0 0.0
        %1145 = vmatpush1.msra.mxu0 0.0
        %1146 = vmatprep.subr.mxu0 0.0
        %1147 = vmatpush1.msra.mxu0 0.0
        %1148 = vmatprep.subr.mxu0 0.0
        %1149 = vmatpush1.msra.mxu0 0.0
        %1150 = vmatprep.subr.mxu0 0.0
        %1151 = vmatpush1.msra.mxu0 0.0
        %1152 = vmatprep.subr.mxu0 0.0
        %1153 = vmatpush1.msra.mxu0 0.0
        %1154 = vmatprep.subr.mxu0 0.0
        %1155 = vmatpush1.msra.mxu0 0.0
        %1156 = vmatprep.subr.mxu0 0.0
        %1157 = vmatpush1.msra.mxu0 0.0
        %1158 = vmatprep.subr.mxu0 0.0
        %1159 = vmatpush1.msra.mxu0 0.0
        %1160 = vmatprep.subr.mxu0 0.0
        %1161 = vmatpush1.msra.mxu0 0.0
        %1162 = vmatprep.subr.mxu0 0.0
        %1163 = vmatpush1.msra.mxu0 0.0
        %1164 = vmatprep.mubr.f32.mxu0 0.0
        %1165 = vmatmul.mubr.f32.gmra.mrb[0].mxu0 %v1098
        %v1166 = vpop.f32.mrb[0].mxu0
        %v1167 = vadd.f32 0.0, %v1166
        %v1168 = vpop.f32.mrb[0].mxu0
        %1169 = vdwg.mxu0
        %v1170 = vmul.f32 %v1167, %v1079
        %v1171 = vadd.f32 %v1170, %v1085
        %v1172 = vxor.u32 %v1171, 2147483648
        %v1173 = vmul.f32 %v1172, 1.442695
        %v1174 = vpow.pop %v1173
        %v1175 = vadd.f32 %v1174, 1.0
        %v1176 = vrcp.pop %v1175
        %v1177 = vmul.f32 1.0, %v1176
        %v1178 = vmul.f32 %v1171, %v1177
        %v1179 = vmul.f32 %v1178, %v1094
        %s1180 = scalar_lea.vmem [#allocation2], 48
        %1181 = vst.msk [vmem:[%s1180] sm:$0xff] %vm959, %v1095
        %v1183 = vrot.slane %v1179, 7
        %v1185 = vsel %vm968, 0.0, %v1183
        %1186 = vst.msk [vmem:[#allocation2] sm:$0xff] %vm959, %v1185
        %1187 = vst.msk [vmem:[#allocation2 + $0x8] sm:$0x1] %vm973, %v1183
        %v1188 = vld [vmem:[#allocation2] sm:$0xff]
        %v1189 = vld [vmem:[#allocation2 + $0x10] sm:$0xff]
        %v1190 = vld [vmem:[%s6] sm:$0x3]
        %v1191 = vld [vmem:[%s1180] sm:$0xff]
        %v1192 = vld [vmem:[%s1180 + $0x10] sm:$0xff]
        %s1193 = scalar_lea.vmem %s6, 2
        %v1194 = vld [vmem:[%s1193] sm:$0x3]
        %v1196 = vsel %vm959, %v1191, 0
        %v1199 = vsel %vm959, %v1192, 0
        %vm1201 = vcmask 1041408
        %v1203 = vsel %vm1201, %v1194, 0
        %1205 = vmatprep.subr.mxu0 0.0
        %1206 = vmatpush1.msra.mxu0 %v1203
        %1207 = vmatprep.subr.mxu0 0.0
        %1208 = vmatpush1.msra.mxu0 0.0
        %1209 = vmatprep.subr.mxu0 0.0
        %1210 = vmatpush1.msra.mxu0 0.0
        %1211 = vmatprep.subr.mxu0 0.0
        %1212 = vmatpush1.msra.mxu0 0.0
        %1213 = vmatprep.subr.mxu0 0.0
        %1214 = vmatpush1.msra.mxu0 0.0
        %1215 = vmatprep.subr.mxu0 0.0
        %1216 = vmatpush1.msra.mxu0 0.0
        %1217 = vmatprep.subr.mxu0 0.0
        %1218 = vmatpush1.msra.mxu0 0.0
        %1219 = vmatprep.subr.mxu0 0.0
        %1220 = vmatpush1.msra.mxu0 0.0
        %1221 = vmatprep.subr.mxu0 0.0
        %1222 = vmatpush1.msra.mxu0 0.0
        %1223 = vmatprep.subr.mxu0 0.0
        %1224 = vmatpush1.msra.mxu0 0.0
        %1225 = vmatprep.subr.mxu0 0.0
        %1226 = vmatpush1.msra.mxu0 0.0
        %1227 = vmatprep.subr.mxu0 0.0
        %1228 = vmatpush1.msra.mxu0 0.0
        %1229 = vmatprep.subr.mxu0 0.0
        %1230 = vmatpush1.msra.mxu0 0.0
        %1231 = vmatprep.subr.mxu0 0.0
        %1232 = vmatpush1.msra.mxu0 0.0
        %1233 = vmatprep.subr.mxu0 0.0
        %1234 = vmatpush1.msra.mxu0 0.0
        %1235 = vmatprep.subr.mxu0 0.0
        %1236 = vmatpush1.msra.mxu0 0.0
        %1237 = vmatprep.subr.mxu0 0.0
        %1238 = vmatpush1.msra.mxu0 0.0
        %1239 = vmatprep.subr.mxu0 0.0
        %1240 = vmatpush1.msra.mxu0 0.0
        %1241 = vmatprep.subr.mxu0 0.0
        %1242 = vmatpush1.msra.mxu0 0.0
        %1243 = vmatprep.subr.mxu0 0.0
        %1244 = vmatpush1.msra.mxu0 0.0
        %1245 = vmatprep.subr.mxu0 0.0
        %1246 = vmatpush1.msra.mxu0 0.0
        %1247 = vmatprep.subr.mxu0 0.0
        %1248 = vmatpush1.msra.mxu0 0.0
        %1249 = vmatprep.subr.mxu0 0.0
        %1250 = vmatpush1.msra.mxu0 0.0
        %1251 = vmatprep.subr.mxu0 0.0
        %1252 = vmatpush1.msra.mxu0 0.0
        %1253 = vmatprep.subr.mxu0 0.0
        %1254 = vmatpush1.msra.mxu0 0.0
        %1255 = vmatprep.subr.mxu0 0.0
        %1256 = vmatpush1.msra.mxu0 0.0
        %1257 = vmatprep.subr.mxu0 0.0
        %1258 = vmatpush1.msra.mxu0 0.0
        %1259 = vmatprep.subr.mxu0 0.0
        %1260 = vmatpush1.msra.mxu0 0.0
        %1261 = vmatprep.subr.mxu0 0.0
        %1262 = vmatpush1.msra.mxu0 0.0
        %1263 = vmatprep.subr.mxu0 0.0
        %1264 = vmatpush1.msra.mxu0 0.0
        %1265 = vmatprep.subr.mxu0 0.0
        %1266 = vmatpush1.msra.mxu0 0.0
        %1267 = vmatprep.subr.mxu0 0.0
        %1268 = vmatpush1.msra.mxu0 0.0
        %1269 = vmatprep.mubr.f32.mxu0 0.0
        %1270 = vmatmul.mubr.f32.gmra.mrb[0].mxu0 %v1196
        %v1271 = vpop.f32.mrb[0].mxu0
        %v1272 = vadd.f32 0.0, %v1271
        %v1273 = vpop.f32.mrb[0].mxu0
        %1274 = vmatprep.mubr.f32.mxu0 0.0
        %1275 = vmatmul.mubr.f32.gmra.mrb[0].mxu0 %v1199
        %v1276 = vpop.f32.mrb[0].mxu0
        %v1277 = vadd.f32 0.0, %v1276
        %v1278 = vpop.f32.mrb[0].mxu0
        %1279 = vdwg.mxu0
        %v1281 = vsel %vm959, %v1188, 0
        %v1284 = vsel %vm959, %v1189, 0
        %v1287 = vsel %vm1201, %v1190, 0
        %1289 = vmatprep.subr.mxu0 0.0
        %1290 = vmatpush1.msra.mxu0 %v1287
        %1291 = vmatprep.subr.mxu0 0.0
        %1292 = vmatpush1.msra.mxu0 0.0
        %1293 = vmatprep.subr.mxu0 0.0
        %1294 = vmatpush1.msra.mxu0 0.0
        %1295 = vmatprep.subr.mxu0 0.0
        %1296 = vmatpush1.msra.mxu0 0.0
        %1297 = vmatprep.subr.mxu0 0.0
        %1298 = vmatpush1.msra.mxu0 0.0
        %1299 = vmatprep.subr.mxu0 0.0
        %1300 = vmatpush1.msra.mxu0 0.0
        %1301 = vmatprep.subr.mxu0 0.0
        %1302 = vmatpush1.msra.mxu0 0.0
        %1303 = vmatprep.subr.mxu0 0.0
        %1304 = vmatpush1.msra.mxu0 0.0
        %1305 = vmatprep.subr.mxu0 0.0
        %1306 = vmatpush1.msra.mxu0 0.0
        %1307 = vmatprep.subr.mxu0 0.0
        %1308 = vmatpush1.msra.mxu0 0.0
        %1309 = vmatprep.subr.mxu0 0.0
        %1310 = vmatpush1.msra.mxu0 0.0
        %1311 = vmatprep.subr.mxu0 0.0
        %1312 = vmatpush1.msra.mxu0 0.0
        %1313 = vmatprep.subr.mxu0 0.0
        %1314 = vmatpush1.msra.mxu0 0.0
        %1315 = vmatprep.subr.mxu0 0.0
        %1316 = vmatpush1.msra.mxu0 0.0
        %1317 = vmatprep.subr.mxu0 0.0
        %1318 = vmatpush1.msra.mxu0 0.0
        %1319 = vmatprep.subr.mxu0 0.0
        %1320 = vmatpush1.msra.mxu0 0.0
        %1321 = vmatprep.subr.mxu0 0.0
        %1322 = vmatpush1.msra.mxu0 0.0
        %1323 = vmatprep.subr.mxu0 0.0
        %1324 = vmatpush1.msra.mxu0 0.0
        %1325 = vmatprep.subr.mxu0 0.0
        %1326 = vmatpush1.msra.mxu0 0.0
        %1327 = vmatprep.subr.mxu0 0.0
        %1328 = vmatpush1.msra.mxu0 0.0
        %1329 = vmatprep.subr.mxu0 0.0
        %1330 = vmatpush1.msra.mxu0 0.0
        %1331 = vmatprep.subr.mxu0 0.0
        %1332 = vmatpush1.msra.mxu0 0.0
        %1333 = vmatprep.subr.mxu0 0.0
        %1334 = vmatpush1.msra.mxu0 0.0
        %1335 = vmatprep.subr.mxu0 0.0
        %1336 = vmatpush1.msra.mxu0 0.0
        %1337 = vmatprep.subr.mxu0 0.0
        %1338 = vmatpush1.msra.mxu0 0.0
        %1339 = vmatprep.subr.mxu0 0.0
        %1340 = vmatpush1.msra.mxu0 0.0
        %1341 = vmatprep.subr.mxu0 0.0
        %1342 = vmatpush1.msra.mxu0 0.0
        %1343 = vmatprep.subr.mxu0 0.0
        %1344 = vmatpush1.msra.mxu0 0.0
        %1345 = vmatprep.subr.mxu0 0.0
        %1346 = vmatpush1.msra.mxu0 0.0
        %1347 = vmatprep.subr.mxu0 0.0
        %1348 = vmatpush1.msra.mxu0 0.0
        %1349 = vmatprep.subr.mxu0 0.0
        %1350 = vmatpush1.msra.mxu0 0.0
        %1351 = vmatprep.subr.mxu0 0.0
        %1352 = vmatpush1.msra.mxu0 0.0
        %1353 = vmatprep.mubr.f32.mxu0 0.0
        %1354 = vmatmul.mubr.f32.gmra.mrb[0].mxu0 %v1281
        %v1355 = vpop.f32.mrb[0].mxu0
        %v1356 = vadd.f32 %v1272, %v1355
        %v1357 = vpop.f32.mrb[0].mxu0
        %1358 = vmatprep.mubr.f32.mxu0 0.0
        %1359 = vmatmul.mubr.f32.gmra.mrb[0].mxu0 %v1284
        %v1360 = vpop.f32.mrb[0].mxu0
        %v1361 = vadd.f32 %v1277, %v1360
        %v1362 = vpop.f32.mrb[0].mxu0
        %1363 = vdwg.mxu0
        %v1364 = vld [vmem:[#allocation2 + $0x1] sm:$0xff]
        %v1365 = vld [vmem:[#allocation2 + $0x11] sm:$0xff]
        %s1366 = scalar_lea.vmem %s6, 4
        %v1367 = vld [vmem:[%s1366] sm:$0x3]
        %v1369 = vsel %vm959, %v1364, 0
        %v1372 = vsel %vm959, %v1365, 0
        %v1375 = vsel %vm1201, %v1367, 0
        %1377 = vmatprep.subr.mxu0 0.0
        %1378 = vmatpush1.msra.mxu0 %v1375
        %1379 = vmatprep.subr.mxu0 0.0
        %1380 = vmatpush1.msra.mxu0 0.0
        %1381 = vmatprep.subr.mxu0 0.0
        %1382 = vmatpush1.msra.mxu0 0.0
        %1383 = vmatprep.subr.mxu0 0.0
        %1384 = vmatpush1.msra.mxu0 0.0
        %1385 = vmatprep.subr.mxu0 0.0
        %1386 = vmatpush1.msra.mxu0 0.0
        %1387 = vmatprep.subr.mxu0 0.0
        %1388 = vmatpush1.msra.mxu0 0.0
        %1389 = vmatprep.subr.mxu0 0.0
        %1390 = vmatpush1.msra.mxu0 0.0
        %1391 = vmatprep.subr.mxu0 0.0
        %1392 = vmatpush1.msra.mxu0 0.0
        %1393 = vmatprep.subr.mxu0 0.0
        %1394 = vmatpush1.msra.mxu0 0.0
        %1395 = vmatprep.subr.mxu0 0.0
        %1396 = vmatpush1.msra.mxu0 0.0
        %1397 = vmatprep.subr.mxu0 0.0
        %1398 = vmatpush1.msra.mxu0 0.0
        %1399 = vmatprep.subr.mxu0 0.0
        %1400 = vmatpush1.msra.mxu0 0.0
        %1401 = vmatprep.subr.mxu0 0.0
        %1402 = vmatpush1.msra.mxu0 0.0
        %1403 = vmatprep.subr.mxu0 0.0
        %1404 = vmatpush1.msra.mxu0 0.0
        %1405 = vmatprep.subr.mxu0 0.0
        %1406 = vmatpush1.msra.mxu0 0.0
        %1407 = vmatprep.subr.mxu0 0.0
        %1408 = vmatpush1.msra.mxu0 0.0
        %1409 = vmatprep.subr.mxu0 0.0
        %1410 = vmatpush1.msra.mxu0 0.0
        %1411 = vmatprep.subr.mxu0 0.0
        %1412 = vmatpush1.msra.mxu0 0.0
        %1413 = vmatprep.subr.mxu0 0.0
        %1414 = vmatpush1.msra.mxu0 0.0
        %1415 = vmatprep.subr.mxu0 0.0
        %1416 = vmatpush1.msra.mxu0 0.0
        %1417 = vmatprep.subr.mxu0 0.0
        %1418 = vmatpush1.msra.mxu0 0.0
        %1419 = vmatprep.subr.mxu0 0.0
        %1420 = vmatpush1.msra.mxu0 0.0
        %1421 = vmatprep.subr.mxu0 0.0
        %1422 = vmatpush1.msra.mxu0 0.0
        %1423 = vmatprep.subr.mxu0 0.0
        %1424 = vmatpush1.msra.mxu0 0.0
        %1425 = vmatprep.subr.mxu0 0.0
        %1426 = vmatpush1.msra.mxu0 0.0
        %1427 = vmatprep.subr.mxu0 0.0
        %1428 = vmatpush1.msra.mxu0 0.0
        %1429 = vmatprep.subr.mxu0 0.0
        %1430 = vmatpush1.msra.mxu0 0.0
        %1431 = vmatprep.subr.mxu0 0.0
        %1432 = vmatpush1.msra.mxu0 0.0
        %1433 = vmatprep.subr.mxu0 0.0
        %1434 = vmatpush1.msra.mxu0 0.0
        %1435 = vmatprep.subr.mxu0 0.0
        %1436 = vmatpush1.msra.mxu0 0.0
        %1437 = vmatprep.subr.mxu0 0.0
        %1438 = vmatpush1.msra.mxu0 0.0
        %1439 = vmatprep.subr.mxu0 0.0
        %1440 = vmatpush1.msra.mxu0 0.0
        %1441 = vmatprep.mubr.f32.mxu0 0.0
        %1442 = vmatmul.mubr.f32.gmra.mrb[0].mxu0 %v1369
        %v1443 = vpop.f32.mrb[0].mxu0
        %v1444 = vadd.f32 0.0, %v1443
        %v1445 = vpop.f32.mrb[0].mxu0
        %1446 = vmatprep.mubr.f32.mxu0 0.0
        %1447 = vmatmul.mubr.f32.gmra.mrb[0].mxu0 %v1372
        %v1448 = vpop.f32.mrb[0].mxu0
        %v1449 = vadd.f32 0.0, %v1448
        %v1450 = vpop.f32.mrb[0].mxu0
        %1451 = vdwg.mxu0
        %v1452 = vadd.f32 %v1356, %v1444
        %v1453 = vadd.f32 %v1361, %v1449
        %v1454 = vld [vmem:[%s971] sm:$0xff]
        %v1455 = vld [vmem:[%s971 + $0x10] sm:$0xff]
        %s1456 = scalar_lea.vmem %s6, 6
        %v1457 = vld [vmem:[%s1456] sm:$0x3]
        %v1459 = vsel %vm959, %v1454, 0
        %v1462 = vsel %vm959, %v1455, 0
        %v1465 = vsel %vm1201, %v1457, 0
        %1467 = vmatprep.subr.mxu0 0.0
        %1468 = vmatpush1.msra.mxu0 %v1465
        %1469 = vmatprep.subr.mxu0 0.0
        %1470 = vmatpush1.msra.mxu0 0.0
        %1471 = vmatprep.subr.mxu0 0.0
        %1472 = vmatpush1.msra.mxu0 0.0
        %1473 = vmatprep.subr.mxu0 0.0
        %1474 = vmatpush1.msra.mxu0 0.0
        %1475 = vmatprep.subr.mxu0 0.0
        %1476 = vmatpush1.msra.mxu0 0.0
        %1477 = vmatprep.subr.mxu0 0.0
        %1478 = vmatpush1.msra.mxu0 0.0
        %1479 = vmatprep.subr.mxu0 0.0
        %1480 = vmatpush1.msra.mxu0 0.0
        %1481 = vmatprep.subr.mxu0 0.0
        %1482 = vmatpush1.msra.mxu0 0.0
        %1483 = vmatprep.subr.mxu0 0.0
        %1484 = vmatpush1.msra.mxu0 0.0
        %1485 = vmatprep.subr.mxu0 0.0
        %1486 = vmatpush1.msra.mxu0 0.0
        %1487 = vmatprep.subr.mxu0 0.0
        %1488 = vmatpush1.msra.mxu0 0.0
        %1489 = vmatprep.subr.mxu0 0.0
        %1490 = vmatpush1.msra.mxu0 0.0
        %1491 = vmatprep.subr.mxu0 0.0
        %1492 = vmatpush1.msra.mxu0 0.0
        %1493 = vmatprep.subr.mxu0 0.0
        %1494 = vmatpush1.msra.mxu0 0.0
        %1495 = vmatprep.subr.mxu0 0.0
        %1496 = vmatpush1.msra.mxu0 0.0
        %1497 = vmatprep.subr.mxu0 0.0
        %1498 = vmatpush1.msra.mxu0 0.0
        %1499 = vmatprep.subr.mxu0 0.0
        %1500 = vmatpush1.msra.mxu0 0.0
        %1501 = vmatprep.subr.mxu0 0.0
        %1502 = vmatpush1.msra.mxu0 0.0
        %1503 = vmatprep.subr.mxu0 0.0
        %1504 = vmatpush1.msra.mxu0 0.0
        %1505 = vmatprep.subr.mxu0 0.0
        %1506 = vmatpush1.msra.mxu0 0.0
        %1507 = vmatprep.subr.mxu0 0.0
        %1508 = vmatpush1.msra.mxu0 0.0
        %1509 = vmatprep.subr.mxu0 0.0
        %1510 = vmatpush1.msra.mxu0 0.0
        %1511 = vmatprep.subr.mxu0 0.0
        %1512 = vmatpush1.msra.mxu0 0.0
        %1513 = vmatprep.subr.mxu0 0.0
        %1514 = vmatpush1.msra.mxu0 0.0
        %1515 = vmatprep.subr.mxu0 0.0
        %1516 = vmatpush1.msra.mxu0 0.0
        %1517 = vmatprep.subr.mxu0 0.0
        %1518 = vmatpush1.msra.mxu0 0.0
        %1519 = vmatprep.subr.mxu0 0.0
        %1520 = vmatpush1.msra.mxu0 0.0
        %1521 = vmatprep.subr.mxu0 0.0
        %1522 = vmatpush1.msra.mxu0 0.0
        %1523 = vmatprep.subr.mxu0 0.0
        %1524 = vmatpush1.msra.mxu0 0.0
        %1525 = vmatprep.subr.mxu0 0.0
        %1526 = vmatpush1.msra.mxu0 0.0
        %1527 = vmatprep.subr.mxu0 0.0
        %1528 = vmatpush1.msra.mxu0 0.0
        %1529 = vmatprep.subr.mxu0 0.0
        %1530 = vmatpush1.msra.mxu0 0.0
        %1531 = vmatprep.mubr.f32.mxu0 0.0
        %1532 = vmatmul.mubr.f32.gmra.mrb[0].mxu0 %v1459
        %v1533 = vpop.f32.mrb[0].mxu0
        %v1534 = vadd.f32 0.0, %v1533
        %v1535 = vpop.f32.mrb[0].mxu0
        %1536 = vmatprep.mubr.f32.mxu0 0.0
        %1537 = vmatmul.mubr.f32.gmra.mrb[0].mxu0 %v1462
        %v1538 = vpop.f32.mrb[0].mxu0
        %v1539 = vadd.f32 0.0, %v1538
        %v1540 = vpop.f32.mrb[0].mxu0
        %1541 = vdwg.mxu0
        %v1542 = vadd.f32 %v1452, %v1534
        %v1543 = vadd.f32 %v1453, %v1539
        %v1544 = vld [vmem:[%s958] sm:$0xff]
        %v1545 = vld [vmem:[%s958 + $0x10] sm:$0xff]
        %s1546 = scalar_lea.vmem %s6, 8
        %v1547 = vld [vmem:[%s1546] sm:$0x3]
        %v1549 = vsel %vm959, %v1544, 0
        %v1552 = vsel %vm959, %v1545, 0
        %v1555 = vsel %vm1201, %v1547, 0
        %1557 = vmatprep.subr.mxu0 0.0
        %1558 = vmatpush1.msra.mxu0 %v1555
        %1559 = vmatprep.subr.mxu0 0.0
        %1560 = vmatpush1.msra.mxu0 0.0
        %1561 = vmatprep.subr.mxu0 0.0
        %1562 = vmatpush1.msra.mxu0 0.0
        %1563 = vmatprep.subr.mxu0 0.0
        %1564 = vmatpush1.msra.mxu0 0.0
        %1565 = vmatprep.subr.mxu0 0.0
        %1566 = vmatpush1.msra.mxu0 0.0
        %1567 = vmatprep.subr.mxu0 0.0
        %1568 = vmatpush1.msra.mxu0 0.0
        %1569 = vmatprep.subr.mxu0 0.0
        %1570 = vmatpush1.msra.mxu0 0.0
        %1571 = vmatprep.subr.mxu0 0.0
        %1572 = vmatpush1.msra.mxu0 0.0
        %1573 = vmatprep.subr.mxu0 0.0
        %1574 = vmatpush1.msra.mxu0 0.0
        %1575 = vmatprep.subr.mxu0 0.0
        %1576 = vmatpush1.msra.mxu0 0.0
        %1577 = vmatprep.subr.mxu0 0.0
        %1578 = vmatpush1.msra.mxu0 0.0
        %1579 = vmatprep.subr.mxu0 0.0
        %1580 = vmatpush1.msra.mxu0 0.0
        %1581 = vmatprep.subr.mxu0 0.0
        %1582 = vmatpush1.msra.mxu0 0.0
        %1583 = vmatprep.subr.mxu0 0.0
        %1584 = vmatpush1.msra.mxu0 0.0
        %1585 = vmatprep.subr.mxu0 0.0
        %1586 = vmatpush1.msra.mxu0 0.0
        %1587 = vmatprep.subr.mxu0 0.0
        %1588 = vmatpush1.msra.mxu0 0.0
        %1589 = vmatprep.subr.mxu0 0.0
        %1590 = vmatpush1.msra.mxu0 0.0
        %1591 = vmatprep.subr.mxu0 0.0
        %1592 = vmatpush1.msra.mxu0 0.0
        %1593 = vmatprep.subr.mxu0 0.0
        %1594 = vmatpush1.msra.mxu0 0.0
        %1595 = vmatprep.subr.mxu0 0.0
        %1596 = vmatpush1.msra.mxu0 0.0
        %1597 = vmatprep.subr.mxu0 0.0
        %1598 = vmatpush1.msra.mxu0 0.0
        %1599 = vmatprep.subr.mxu0 0.0
        %1600 = vmatpush1.msra.mxu0 0.0
        %1601 = vmatprep.subr.mxu0 0.0
        %1602 = vmatpush1.msra.mxu0 0.0
        %1603 = vmatprep.subr.mxu0 0.0
        %1604 = vmatpush1.msra.mxu0 0.0
        %1605 = vmatprep.subr.mxu0 0.0
        %1606 = vmatpush1.msra.mxu0 0.0
        %1607 = vmatprep.subr.mxu0 0.0
        %1608 = vmatpush1.msra.mxu0 0.0
        %1609 = vmatprep.subr.mxu0 0.0
        %1610 = vmatpush1.msra.mxu0 0.0
        %1611 = vmatprep.subr.mxu0 0.0
        %1612 = vmatpush1.msra.mxu0 0.0
        %1613 = vmatprep.subr.mxu0 0.0
        %1614 = vmatpush1.msra.mxu0 0.0
        %1615 = vmatprep.subr.mxu0 0.0
        %1616 = vmatpush1.msra.mxu0 0.0
        %1617 = vmatprep.subr.mxu0 0.0
        %1618 = vmatpush1.msra.mxu0 0.0
        %1619 = vmatprep.subr.mxu0 0.0
        %1620 = vmatpush1.msra.mxu0 0.0
        %1621 = vmatprep.mubr.f32.mxu0 0.0
        %1622 = vmatmul.mubr.f32.gmra.mrb[0].mxu0 %v1549
        %v1623 = vpop.f32.mrb[0].mxu0
        %v1624 = vadd.f32 0.0, %v1623
        %v1625 = vpop.f32.mrb[0].mxu0
        %1626 = vmatprep.mubr.f32.mxu0 0.0
        %1627 = vmatmul.mubr.f32.gmra.mrb[0].mxu0 %v1552
        %v1628 = vpop.f32.mrb[0].mxu0
        %v1629 = vadd.f32 0.0, %v1628
        %v1630 = vpop.f32.mrb[0].mxu0
        %1631 = vdwg.mxu0
        %v1632 = vadd.f32 %v1542, %v1624
        %v1633 = vadd.f32 %v1543, %v1629
        %v1634 = vld [vmem:[%s971 + $0x1] sm:$0xff]
        %v1635 = vld [vmem:[%s971 + $0x11] sm:$0xff]
        %s1636 = scalar_lea.vmem %s6, 10
        %v1637 = vld [vmem:[%s1636] sm:$0x3]
        %v1639 = vsel %vm959, %v1634, 0
        %v1642 = vsel %vm959, %v1635, 0
        %v1645 = vsel %vm1201, %v1637, 0
        %1647 = vmatprep.subr.mxu0 0.0
        %1648 = vmatpush1.msra.mxu0 %v1645
        %1649 = vmatprep.subr.mxu0 0.0
        %1650 = vmatpush1.msra.mxu0 0.0
        %1651 = vmatprep.subr.mxu0 0.0
        %1652 = vmatpush1.msra.mxu0 0.0
        %1653 = vmatprep.subr.mxu0 0.0
        %1654 = vmatpush1.msra.mxu0 0.0
        %1655 = vmatprep.subr.mxu0 0.0
        %1656 = vmatpush1.msra.mxu0 0.0
        %1657 = vmatprep.subr.mxu0 0.0
        %1658 = vmatpush1.msra.mxu0 0.0
        %1659 = vmatprep.subr.mxu0 0.0
        %1660 = vmatpush1.msra.mxu0 0.0
        %1661 = vmatprep.subr.mxu0 0.0
        %1662 = vmatpush1.msra.mxu0 0.0
        %1663 = vmatprep.subr.mxu0 0.0
        %1664 = vmatpush1.msra.mxu0 0.0
        %1665 = vmatprep.subr.mxu0 0.0
        %1666 = vmatpush1.msra.mxu0 0.0
        %1667 = vmatprep.subr.mxu0 0.0
        %1668 = vmatpush1.msra.mxu0 0.0
        %1669 = vmatprep.subr.mxu0 0.0
        %1670 = vmatpush1.msra.mxu0 0.0
        %1671 = vmatprep.subr.mxu0 0.0
        %1672 = vmatpush1.msra.mxu0 0.0
        %1673 = vmatprep.subr.mxu0 0.0
        %1674 = vmatpush1.msra.mxu0 0.0
        %1675 = vmatprep.subr.mxu0 0.0
        %1676 = vmatpush1.msra.mxu0 0.0
        %1677 = vmatprep.subr.mxu0 0.0
        %1678 = vmatpush1.msra.mxu0 0.0
        %1679 = vmatprep.subr.mxu0 0.0
        %1680 = vmatpush1.msra.mxu0 0.0
        %1681 = vmatprep.subr.mxu0 0.0
        %1682 = vmatpush1.msra.mxu0 0.0
        %1683 = vmatprep.subr.mxu0 0.0
        %1684 = vmatpush1.msra.mxu0 0.0
        %1685 = vmatprep.subr.mxu0 0.0
        %1686 = vmatpush1.msra.mxu0 0.0
        %1687 = vmatprep.subr.mxu0 0.0
        %1688 = vmatpush1.msra.mxu0 0.0
        %1689 = vmatprep.subr.mxu0 0.0
        %1690 = vmatpush1.msra.mxu0 0.0
        %1691 = vmatprep.subr.mxu0 0.0
        %1692 = vmatpush1.msra.mxu0 0.0
        %1693 = vmatprep.subr.mxu0 0.0
        %1694 = vmatpush1.msra.mxu0 0.0
        %1695 = vmatprep.subr.mxu0 0.0
        %1696 = vmatpush1.msra.mxu0 0.0
        %1697 = vmatprep.subr.mxu0 0.0
        %1698 = vmatpush1.msra.mxu0 0.0
        %1699 = vmatprep.subr.mxu0 0.0
        %1700 = vmatpush1.msra.mxu0 0.0
        %1701 = vmatprep.subr.mxu0 0.0
        %1702 = vmatpush1.msra.mxu0 0.0
        %1703 = vmatprep.subr.mxu0 0.0
        %1704 = vmatpush1.msra.mxu0 0.0
        %1705 = vmatprep.subr.mxu0 0.0
        %1706 = vmatpush1.msra.mxu0 0.0
        %1707 = vmatprep.subr.mxu0 0.0
        %1708 = vmatpush1.msra.mxu0 0.0
        %1709 = vmatprep.subr.mxu0 0.0
        %1710 = vmatpush1.msra.mxu0 0.0
        %1711 = vmatprep.mubr.f32.mxu0 0.0
        %1712 = vmatmul.mubr.f32.gmra.mrb[0].mxu0 %v1639
        %v1713 = vpop.f32.mrb[0].mxu0
        %v1714 = vadd.f32 0.0, %v1713
        %v1715 = vpop.f32.mrb[0].mxu0
        %1716 = vmatprep.mubr.f32.mxu0 0.0
        %1717 = vmatmul.mubr.f32.gmra.mrb[0].mxu0 %v1642
        %v1718 = vpop.f32.mrb[0].mxu0
        %v1719 = vadd.f32 0.0, %v1718
        %v1720 = vpop.f32.mrb[0].mxu0
        %1721 = vdwg.mxu0
        %v1722 = vadd.f32 %v1632, %v1714
        %v1723 = vadd.f32 %v1633, %v1719
        %v1724 = vld [vmem:[%s988] sm:$0xff]
        %v1725 = vld [vmem:[%s988 + $0x10] sm:$0xff]
        %s1726 = scalar_lea.vmem %s6, 12
        %v1727 = vld [vmem:[%s1726] sm:$0x3]
        %v1729 = vsel %vm959, %v1724, 0
        %v1732 = vsel %vm959, %v1725, 0
        %v1735 = vsel %vm1201, %v1727, 0
        %1737 = vmatprep.subr.mxu0 0.0
        %1738 = vmatpush1.msra.mxu0 %v1735
        %1739 = vmatprep.subr.mxu0 0.0
        %1740 = vmatpush1.msra.mxu0 0.0
        %1741 = vmatprep.subr.mxu0 0.0
        %1742 = vmatpush1.msra.mxu0 0.0
        %1743 = vmatprep.subr.mxu0 0.0
        %1744 = vmatpush1.msra.mxu0 0.0
        %1745 = vmatprep.subr.mxu0 0.0
        %1746 = vmatpush1.msra.mxu0 0.0
        %1747 = vmatprep.subr.mxu0 0.0
        %1748 = vmatpush1.msra.mxu0 0.0
        %1749 = vmatprep.subr.mxu0 0.0
        %1750 = vmatpush1.msra.mxu0 0.0
        %1751 = vmatprep.subr.mxu0 0.0
        %1752 = vmatpush1.msra.mxu0 0.0
        %1753 = vmatprep.subr.mxu0 0.0
        %1754 = vmatpush1.msra.mxu0 0.0
        %1755 = vmatprep.subr.mxu0 0.0
        %1756 = vmatpush1.msra.mxu0 0.0
        %1757 = vmatprep.subr.mxu0 0.0
        %1758 = vmatpush1.msra.mxu0 0.0
        %1759 = vmatprep.subr.mxu0 0.0
        %1760 = vmatpush1.msra.mxu0 0.0
        %1761 = vmatprep.subr.mxu0 0.0
        %1762 = vmatpush1.msra.mxu0 0.0
        %1763 = vmatprep.subr.mxu0 0.0
        %1764 = vmatpush1.msra.mxu0 0.0
        %1765 = vmatprep.subr.mxu0 0.0
        %1766 = vmatpush1.msra.mxu0 0.0
        %1767 = vmatprep.subr.mxu0 0.0
        %1768 = vmatpush1.msra.mxu0 0.0
        %1769 = vmatprep.subr.mxu0 0.0
        %1770 = vmatpush1.msra.mxu0 0.0
        %1771 = vmatprep.subr.mxu0 0.0
        %1772 = vmatpush1.msra.mxu0 0.0
        %1773 = vmatprep.subr.mxu0 0.0
        %1774 = vmatpush1.msra.mxu0 0.0
        %1775 = vmatprep.subr.mxu0 0.0
        %1776 = vmatpush1.msra.mxu0 0.0
        %1777 = vmatprep.subr.mxu0 0.0
        %1778 = vmatpush1.msra.mxu0 0.0
        %1779 = vmatprep.subr.mxu0 0.0
        %1780 = vmatpush1.msra.mxu0 0.0
        %1781 = vmatprep.subr.mxu0 0.0
        %1782 = vmatpush1.msra.mxu0 0.0
        %1783 = vmatprep.subr.mxu0 0.0
        %1784 = vmatpush1.msra.mxu0 0.0
        %1785 = vmatprep.subr.mxu0 0.0
        %1786 = vmatpush1.msra.mxu0 0.0
        %1787 = vmatprep.subr.mxu0 0.0
        %1788 = vmatpush1.msra.mxu0 0.0
        %1789 = vmatprep.subr.mxu0 0.0
        %1790 = vmatpush1.msra.mxu0 0.0
        %1791 = vmatprep.subr.mxu0 0.0
        %1792 = vmatpush1.msra.mxu0 0.0
        %1793 = vmatprep.subr.mxu0 0.0
        %1794 = vmatpush1.msra.mxu0 0.0
        %1795 = vmatprep.subr.mxu0 0.0
        %1796 = vmatpush1.msra.mxu0 0.0
        %1797 = vmatprep.subr.mxu0 0.0
        %1798 = vmatpush1.msra.mxu0 0.0
        %1799 = vmatprep.subr.mxu0 0.0
        %1800 = vmatpush1.msra.mxu0 0.0
        %1801 = vmatprep.mubr.f32.mxu0 0.0
        %1802 = vmatmul.mubr.f32.gmra.mrb[0].mxu0 %v1729
        %v1803 = vpop.f32.mrb[0].mxu0
        %v1804 = vadd.f32 0.0, %v1803
        %v1805 = vpop.f32.mrb[0].mxu0
        %1806 = vmatprep.mubr.f32.mxu0 0.0
        %1807 = vmatmul.mubr.f32.gmra.mrb[0].mxu0 %v1732
        %v1808 = vpop.f32.mrb[0].mxu0
        %v1809 = vadd.f32 0.0, %v1808
        %v1810 = vpop.f32.mrb[0].mxu0
        %1811 = vdwg.mxu0
        %v1812 = vadd.f32 %v1722, %v1804
        %v1813 = vadd.f32 %v1723, %v1809
        %v1814 = vld [vmem:[%s977] sm:$0xff]
        %v1815 = vld [vmem:[%s977 + $0x10] sm:$0xff]
        %s1816 = scalar_lea.vmem %s6, 14
        %v1817 = vld [vmem:[%s1816] sm:$0x3]
        %v1819 = vsel %vm959, %v1814, 0
        %v1822 = vsel %vm959, %v1815, 0
        %v1825 = vsel %vm1201, %v1817, 0
        %1827 = vmatprep.subr.mxu0 0.0
        %1828 = vmatpush1.msra.mxu0 %v1825
        %1829 = vmatprep.subr.mxu0 0.0
        %1830 = vmatpush1.msra.mxu0 0.0
        %1831 = vmatprep.subr.mxu0 0.0
        %1832 = vmatpush1.msra.mxu0 0.0
        %1833 = vmatprep.subr.mxu0 0.0
        %1834 = vmatpush1.msra.mxu0 0.0
        %1835 = vmatprep.subr.mxu0 0.0
        %1836 = vmatpush1.msra.mxu0 0.0
        %1837 = vmatprep.subr.mxu0 0.0
        %1838 = vmatpush1.msra.mxu0 0.0
        %1839 = vmatprep.subr.mxu0 0.0
        %1840 = vmatpush1.msra.mxu0 0.0
        %1841 = vmatprep.subr.mxu0 0.0
        %1842 = vmatpush1.msra.mxu0 0.0
        %1843 = vmatprep.subr.mxu0 0.0
        %1844 = vmatpush1.msra.mxu0 0.0
        %1845 = vmatprep.subr.mxu0 0.0
        %1846 = vmatpush1.msra.mxu0 0.0
        %1847 = vmatprep.subr.mxu0 0.0
        %1848 = vmatpush1.msra.mxu0 0.0
        %1849 = vmatprep.subr.mxu0 0.0
        %1850 = vmatpush1.msra.mxu0 0.0
        %1851 = vmatprep.subr.mxu0 0.0
        %1852 = vmatpush1.msra.mxu0 0.0
        %1853 = vmatprep.subr.mxu0 0.0
        %1854 = vmatpush1.msra.mxu0 0.0
        %1855 = vmatprep.subr.mxu0 0.0
        %1856 = vmatpush1.msra.mxu0 0.0
        %1857 = vmatprep.subr.mxu0 0.0
        %1858 = vmatpush1.msra.mxu0 0.0
        %1859 = vmatprep.subr.mxu0 0.0
        %1860 = vmatpush1.msra.mxu0 0.0
        %1861 = vmatprep.subr.mxu0 0.0
        %1862 = vmatpush1.msra.mxu0 0.0
        %1863 = vmatprep.subr.mxu0 0.0
        %1864 = vmatpush1.msra.mxu0 0.0
        %1865 = vmatprep.subr.mxu0 0.0
        %1866 = vmatpush1.msra.mxu0 0.0
        %1867 = vmatprep.subr.mxu0 0.0
        %1868 = vmatpush1.msra.mxu0 0.0
        %1869 = vmatprep.subr.mxu0 0.0
        %1870 = vmatpush1.msra.mxu0 0.0
        %1871 = vmatprep.subr.mxu0 0.0
        %1872 = vmatpush1.msra.mxu0 0.0
        %1873 = vmatprep.subr.mxu0 0.0
        %1874 = vmatpush1.msra.mxu0 0.0
        %1875 = vmatprep.subr.mxu0 0.0
        %1876 = vmatpush1.msra.mxu0 0.0
        %1877 = vmatprep.subr.mxu0 0.0
        %1878 = vmatpush1.msra.mxu0 0.0
        %1879 = vmatprep.subr.mxu0 0.0
        %1880 = vmatpush1.msra.mxu0 0.0
        %1881 = vmatprep.subr.mxu0 0.0
        %1882 = vmatpush1.msra.mxu0 0.0
        %1883 = vmatprep.subr.mxu0 0.0
        %1884 = vmatpush1.msra.mxu0 0.0
        %1885 = vmatprep.subr.mxu0 0.0
        %1886 = vmatpush1.msra.mxu0 0.0
        %1887 = vmatprep.subr.mxu0 0.0
        %1888 = vmatpush1.msra.mxu0 0.0
        %1889 = vmatprep.subr.mxu0 0.0
        %1890 = vmatpush1.msra.mxu0 0.0
        %1891 = vmatprep.mubr.f32.mxu0 0.0
        %1892 = vmatmul.mubr.f32.gmra.mrb[0].mxu0 %v1819
        %v1893 = vpop.f32.mrb[0].mxu0
        %v1894 = vadd.f32 0.0, %v1893
        %v1895 = vpop.f32.mrb[0].mxu0
        %1896 = vmatprep.mubr.f32.mxu0 0.0
        %1897 = vmatmul.mubr.f32.gmra.mrb[0].mxu0 %v1822
        %v1898 = vpop.f32.mrb[0].mxu0
        %v1899 = vadd.f32 0.0, %v1898
        %v1900 = vpop.f32.mrb[0].mxu0
        %1901 = vdwg.mxu0
        %v1902 = vadd.f32 %v1812, %v1894
        %v1903 = vadd.f32 %v1813, %v1899
        %v1904 = vld [vmem:[%s988 + $0x1] sm:$0xff]
        %v1905 = vld [vmem:[%s988 + $0x11] sm:$0xff]
        %s1906 = scalar_lea.vmem %s6, 16
        %v1907 = vld [vmem:[%s1906] sm:$0x3]
        %v1909 = vsel %vm959, %v1904, 0
        %v1912 = vsel %vm959, %v1905, 0
        %v1915 = vsel %vm1201, %v1907, 0
        %1917 = vmatprep.subr.mxu0 0.0
        %1918 = vmatpush1.msra.mxu0 %v1915
        %1919 = vmatprep.subr.mxu0 0.0
        %1920 = vmatpush1.msra.mxu0 0.0
        %1921 = vmatprep.subr.mxu0 0.0
        %1922 = vmatpush1.msra.mxu0 0.0
        %1923 = vmatprep.subr.mxu0 0.0
        %1924 = vmatpush1.msra.mxu0 0.0
        %1925 = vmatprep.subr.mxu0 0.0
        %1926 = vmatpush1.msra.mxu0 0.0
        %1927 = vmatprep.subr.mxu0 0.0
        %1928 = vmatpush1.msra.mxu0 0.0
        %1929 = vmatprep.subr.mxu0 0.0
        %1930 = vmatpush1.msra.mxu0 0.0
        %1931 = vmatprep.subr.mxu0 0.0
        %1932 = vmatpush1.msra.mxu0 0.0
        %1933 = vmatprep.subr.mxu0 0.0
        %1934 = vmatpush1.msra.mxu0 0.0
        %1935 = vmatprep.subr.mxu0 0.0
        %1936 = vmatpush1.msra.mxu0 0.0
        %1937 = vmatprep.subr.mxu0 0.0
        %1938 = vmatpush1.msra.mxu0 0.0
        %1939 = vmatprep.subr.mxu0 0.0
        %1940 = vmatpush1.msra.mxu0 0.0
        %1941 = vmatprep.subr.mxu0 0.0
        %1942 = vmatpush1.msra.mxu0 0.0
        %1943 = vmatprep.subr.mxu0 0.0
        %1944 = vmatpush1.msra.mxu0 0.0
        %1945 = vmatprep.subr.mxu0 0.0
        %1946 = vmatpush1.msra.mxu0 0.0
        %1947 = vmatprep.subr.mxu0 0.0
        %1948 = vmatpush1.msra.mxu0 0.0
        %1949 = vmatprep.subr.mxu0 0.0
        %1950 = vmatpush1.msra.mxu0 0.0
        %1951 = vmatprep.subr.mxu0 0.0
        %1952 = vmatpush1.msra.mxu0 0.0
        %1953 = vmatprep.subr.mxu0 0.0
        %1954 = vmatpush1.msra.mxu0 0.0
        %1955 = vmatprep.subr.mxu0 0.0
        %1956 = vmatpush1.msra.mxu0 0.0
        %1957 = vmatprep.subr.mxu0 0.0
        %1958 = vmatpush1.msra.mxu0 0.0
        %1959 = vmatprep.subr.mxu0 0.0
        %1960 = vmatpush1.msra.mxu0 0.0
        %1961 = vmatprep.subr.mxu0 0.0
        %1962 = vmatpush1.msra.mxu0 0.0
        %1963 = vmatprep.subr.mxu0 0.0
        %1964 = vmatpush1.msra.mxu0 0.0
        %1965 = vmatprep.subr.mxu0 0.0
        %1966 = vmatpush1.msra.mxu0 0.0
        %1967 = vmatprep.subr.mxu0 0.0
        %1968 = vmatpush1.msra.mxu0 0.0
        %1969 = vmatprep.subr.mxu0 0.0
        %1970 = vmatpush1.msra.mxu0 0.0
        %1971 = vmatprep.subr.mxu0 0.0
        %1972 = vmatpush1.msra.mxu0 0.0
        %1973 = vmatprep.subr.mxu0 0.0
        %1974 = vmatpush1.msra.mxu0 0.0
        %1975 = vmatprep.subr.mxu0 0.0
        %1976 = vmatpush1.msra.mxu0 0.0
        %1977 = vmatprep.subr.mxu0 0.0
        %1978 = vmatpush1.msra.mxu0 0.0
        %1979 = vmatprep.subr.mxu0 0.0
        %1980 = vmatpush1.msra.mxu0 0.0
        %1981 = vmatprep.mubr.f32.mxu0 0.0
        %1982 = vmatmul.mubr.f32.gmra.mrb[0].mxu0 %v1909
        %v1983 = vpop.f32.mrb[0].mxu0
        %v1984 = vadd.f32 0.0, %v1983
        %v1985 = vpop.f32.mrb[0].mxu0
        %1986 = vmatprep.mubr.f32.mxu0 0.0
        %1987 = vmatmul.mubr.f32.gmra.mrb[0].mxu0 %v1912
        %v1988 = vpop.f32.mrb[0].mxu0
        %v1989 = vadd.f32 0.0, %v1988
        %v1990 = vpop.f32.mrb[0].mxu0
        %1991 = vdwg.mxu0
        %v1992 = vadd.f32 %v1902, %v1984
        %v1993 = vadd.f32 %v1903, %v1989
        %v1994 = vld [vmem:[%s7] sm:$0x1]
        %v1995 = vlaneseq
        %v1996 = vshrl.u32 %v1995, 7
        %v1997 = vsub.s32 0, %v1996
        %v1998 = vrot.slane %v1994, %v1997
        %v1999 = vmul.f32 %v1992, %v1998
        %v2000 = vmul.f32 %v1993, %v1998
        %v2001 = vld [vmem:[%s7 + $0x1] sm:$0x1]
        %v2002 = vlaneseq
        %v2003 = vshrl.u32 %v2002, 7
        %v2004 = vsub.s32 0, %v2003
        %v2005 = vrot.slane %v2001, %v2004
        %v2006 = vadd.f32 %v1999, %v2005
        %v2007 = vadd.f32 %v2000, %v2005
        %v2008 = vxor.u32 %v2006, 2147483648
        %v2009 = vxor.u32 %v2007, 2147483648
        %v2010 = vmul.f32 %v2008, 1.442695
        %v2011 = vpow.pop %v2010
        %v2012 = vmul.f32 %v2009, 1.442695
        %v2013 = vpow.pop %v2012
        %v2014 = vadd.f32 %v2011, 1.0
        %v2015 = vadd.f32 %v2013, 1.0
        %v2016 = vrcp.pop %v2014
        %v2017 = vmul.f32 1.0, %v2016
        %v2018 = vrcp.pop %v2015
        %v2019 = vmul.f32 1.0, %v2018
        %v2020 = vmul.f32 %v2006, %v2017
        %v2021 = vmul.f32 %v2007, %v2019
        %2024 = vrot.lane.b32.xlu0 %v2020, 2
        %v2025 = vpop.permute.xlu0 %2024
        %2026 = vrot.lane.b32.xlu0 %v2021, 2
        %v2027 = vpop.permute.xlu0 %2026
        %v2030 = vsel %vm959, %v554, %v2025
        %v2031 = vsel %vm959, %v555, %v2027
        %2032 = vst.msk [vmem:[%s413] sm:$0xff] %vm442, %v2030
        %2033 = vst.msk [vmem:[%s413 + $0x8] sm:$0xff] %vm442, %v2031
        %s2034 = smul.u32 2, %s30
        %p2035 = scmp.lt.s32.totalorder %s29, 1
        %s2036 = scalar_select %p2035, %s29, 1
        %p2037 = scmp.lt.s32.totalorder %s2034, 7
        %s2038 = scalar_select %p2037, %s2034, 7
        %s2039 = smul.addr %s2036, 8
        %s2040 = sadd.s32 %s2038, %s2039
        %s2041 = smul.addr %s2040, 8
        %s2042 = scalar_lea.vmem %s8, %s2041
        // Predicated region
        $region61: #{tpu_custom_call.1} parent=51 // pred_check
          %p2043 = pneg %p247
        $region62: #{tpu_custom_call.1} parent=51 // pred_check_branch
          %2045 = sbr.rel (%p2043) target = $region64
        $region63: #{tpu_custom_call.1} parent=51 // pred_region
          %s2046 = smul.u32 2, %s30
        $region64: #{tpu_custom_call.1} parent=51 // pred_fallthru
          _
      $region52: #{tpu_custom_call.1} parent=5 // pred_fallthru
        _
      %p2047 = scmp.le.s32.totalorder 2, %s20
      // Predicated region
      $region65: #{tpu_custom_call.1} parent=5 // pred_check
        %p2048 = pneg %p2047
      $region66: #{tpu_custom_call.1} parent=5 // pred_check_branch
        %2050 = sbr.rel (%p2048) target = $region68
      $region67: #{tpu_custom_call.1} parent=5 // pred_region
        %s2051 = ssub.s32 %s20, 2
        // Predicated region
        $region69: #{tpu_custom_call.1} parent=67 // pred_check
          %p2052 = pneg %p253
        $region70: #{tpu_custom_call.1} parent=67 // pred_check_branch
          %2054 = sbr.rel (%p2052) target = $region72
        $region71: #{tpu_custom_call.1} parent=67 // pred_region
          %s2055 = smul.u32 2, %s32
          %p2056 = scmp.lt.s32.totalorder %s31, 1
          %s2057 = scalar_select %p2056, %s31, 1
          %p2058 = scmp.lt.s32.totalorder %s2055, 7
          %s2059 = scalar_select %p2058, %s2055, 7
          %s2060 = smul.addr %s2057, 8
          %s2061 = sadd.s32 %s2059, %s2060
          %s2062 = smul.addr %s2061, 8
          %s2063 = scalar_lea.vmem %s8, %s2062
        $region72: #{tpu_custom_call.1} parent=67 // pred_fallthru
          _
      $region68: #{tpu_custom_call.1} parent=5 // pred_fallthru
        _
    $region6: #{tpu_custom_call.1} parent=1 // loop_footer
      %s24 = sadd.s32 1, %s20
    $region7: #{tpu_custom_call.1} parent=1 // loop_footer_branch
      %19 = sbr.rel target = $region3
    $region8: #{tpu_custom_call.1} parent=1 // loop_exit
      _
    %2064 = vsyncpa [#allocation4], 1
    %s2065 = scalar_lea.sflag [#allocation4], 1
    %2066 = vsyncpa %s2065, 1
    %2067 = vsyncpa [#allocation6], 1
    %s2068 = scalar_lea.sflag [#allocation6], 1
    %2069 = vsyncpa %s2068, 1

</llo_original>
